<compile_context>
chip_gen: v6e
topology: v6e:2x2x1
jax: 0.10.0
libtpu: 0.0.40
codegen_flags: <defaults>
</compile_context>

<pallas_src>
import functools

import jax
import jax.numpy as jnp
from jax.experimental import pallas as pl
from jax.experimental.pallas import tpu as pltpu


def _tpu_chip_info():
    """Best-effort (tensorcores_per_chip, physical_vmem_bytes) query."""
    cores, vmem = 1, 128 << 20
    try:
        info = pltpu.get_tpu_info()
        for name in ("vmem_capacity_bytes", "vmem_bytes", "vmem_size_bytes"):
            v = getattr(info, name, None)
            if v:
                vmem = int(v)
                break
        for name in ("num_cores", "tensorcores_per_chip", "num_tensorcores",
                     "cores_per_chip"):
            c = getattr(info, name, None)
            if c:
                cores = int(c)
                break
    except Exception:
        pass
    try:
        kind = jax.devices()[0].device_kind.lower()
        if "v7" in kind or "7x" in kind:
            cores = max(cores, 2)          # v7x: 2 TensorCores per chip
            vmem = min(vmem, 64 << 20)     # v7x: 64 MiB VMEM per TC
    except Exception:
        pass
    return cores, vmem


def _vmem_bytes_estimate(Bt, *, L, Dq, H, dk, dv, Dout, in_itemsize, out_itemsize):
    """Rough per-grid-step VMEM footprint (f32 intermediates + 2x-buffered IO)."""
    M = Bt * L
    G = Bt * H
    C = 2 * H * dk + H * dv
    f32 = 4
    interm = (M * C                    # fused projection output
              + 2 * M * C              # q/k/v slabs + head-stacked copies
              + 3 * G * L * L          # scores / probs / softmax temps
              + G * L * dv + M * H * dv  # attention out + lane-concat copy
              + M * Dout) * f32        # recombined output
    io = 2 * (M * Dq * in_itemsize                    # x block (double buffered)
              + (Dq * C + H * dv * Dout) * in_itemsize  # weights
              + M * Dout * out_itemsize)              # out block
    return interm + io


def _pick_batch_block(batch, seq_len, num_cores, vmem_budget, cost_fn,
                      target_rows=512):
    """Batch elements per grid step: as fat as VMEM allows (>=512 projection
    rows), keeping >= num_cores grid steps only on multi-TensorCore chips."""
    bt = min(batch, max(1, pl.cdiv(target_rows, max(seq_len, 1))))
    if num_cores > 1:
        bt = min(bt, max(1, batch // num_cores))
    while bt > 1 and (batch % bt != 0 or cost_fn(bt) > vmem_budget):
        bt -= 1
    return max(bt, 1)


def _mha_kernel(x_ref, w_qkv_ref, wr_ref, o_ref, *, head_count, dk, dv,
                inv_sqrt_d):
    H = head_count
    Bt, L, Dq = x_ref.shape
    M = Bt * L
    Hdk = H * dk

    # --- one fused projection matmul for Q, K, V of every head ---------------
    # Column order: [Q all heads | K all heads | V all heads]; f32 accumulation.
    x2d = x_ref[...].reshape(M, Dq)
    proj = jnp.dot(x2d, w_qkv_ref[...], preferred_element_type=jnp.float32)

    q_all = proj[:, :Hdk]              # (M, H*dk)  contiguous lane slab
    k_all = proj[:, Hdk:2 * Hdk]       # (M, H*dk)
    v_all = proj[:, 2 * Hdk:]          # (M, H*dv)

    # --- head-batched layout (G, L, d), G = H*Bt ------------------------------
    # Per-head contiguous lane slabs stacked onto a new leading group axis;
    # splitting M -> (Bt, L) sublanes is layout-free for L % 8 == 0.
    def to_groups(a, d):
        heads = [a[:, h * d:(h + 1) * d] for h in range(H)]
        return jnp.stack(heads, axis=0).reshape(H * Bt, L, d)

    qh = to_groups(q_all, dk)          # (G, L, dk)
    kh = to_groups(k_all, dk)          # (G, L, dk)
    vh = to_groups(v_all, dv)          # (G, L, dv)

    # --- scaled dot-product attention (softmax in f32) ------------------------
    s = jnp.einsum('gqd,gkd->gqk', qh, kh,
                   preferred_element_type=jnp.float32) * inv_sqrt_d
    s = s - jnp.max(s, axis=-1, keepdims=True)
    p = jnp.exp(s)
    p = p * pl.reciprocal(jnp.sum(p, axis=-1, keepdims=True), approx=True)
    att = jnp.einsum('gqk,gkd->gqd', p, vh,
                     preferred_element_type=jnp.float32)      # (G, L, dv)

    # --- concat heads back onto lanes + ONE recombine matmul ------------------
    # Identical math to concat-heads-then-Linear; contraction dim is H*dv.
    att_h = att.reshape(H, M, dv)
    att2d = jnp.concatenate([att_h[h] for h in range(H)], axis=-1)  # (M, H*dv)
    out = jnp.dot(att2d, wr_ref[...].astype(jnp.float32),
                  preferred_element_type=jnp.float32)               # (M, Dout)

    o_ref[...] = out.reshape(Bt, L, -1).astype(o_ref.dtype)


def mha_v2_forward(queries, wq_t, wk_t, wv_t, wr_t, *, head_count, dk, dv,
                   compute_dtype=jnp.float32, batch_block=None):
    """Pallas forward for _MHA_V2 self-attention (keys/values/mask = None).

    queries: (B, L, Dq)
    wq_t, wk_t: (Dq, H*dk)   (nn.Linear weight transposed)
    wv_t:       (Dq, H*dv)
    wr_t:       (H*dv, Dout)
    returns:    (B, L, Dout)
    compute_dtype: f32 (default) or bf16 for the projection MXU operands / the
                   input DMA (usable on v5e as well — softmax and all head-level
                   math stay f32 in-kernel).
    """
    B, L, Dq = queries.shape
    H = head_count
    Dout = wr_t.shape[1]
    out_dtype = queries.dtype
    inv_sqrt_d = float(dk) ** (-0.5)

    # Fused QKV weight, [Q all heads | K all heads | V all heads] column order
    # (each section is already head-major, matching nn.Linear output layout).
    w_qkv = jnp.concatenate([wq_t, wk_t, wv_t], axis=-1)   # (Dq, 2*H*dk + H*dv)

    num_cores, vmem_phys = _tpu_chip_info()
    vmem_budget = int(0.7 * vmem_phys)

    cost = functools.partial(
        _vmem_bytes_estimate, L=L, Dq=Dq, H=H, dk=dk, dv=dv, Dout=Dout,
        in_itemsize=jnp.dtype(compute_dtype).itemsize,
        out_itemsize=jnp.dtype(out_dtype).itemsize)

    Bt = (_pick_batch_block(B, L, num_cores, vmem_budget, cost)
          if batch_block is None else batch_block)
    assert B % Bt == 0, "batch_block must divide the batch size"

    vmem_limit = int(max(min(4 * cost(Bt), vmem_budget), 32 << 20))

    x = queries.astype(compute_dtype)
    w_qkv = w_qkv.astype(compute_dtype)
    wr = wr_t.astype(compute_dtype)

    kernel = functools.partial(_mha_kernel, head_count=H, dk=dk, dv=dv,
                               inv_sqrt_d=inv_sqrt_d)

    return pl.pallas_call(
        kernel,
        out_shape=jax.ShapeDtypeStruct((B, L, Dout), out_dtype),
        grid_spec=pltpu.PrefetchScalarGridSpec(
            num_scalar_prefetch=0,
            grid=(B // Bt,),
            in_specs=[
                pl.BlockSpec((Bt, L, Dq), lambda b: (b, 0, 0)),
                pl.BlockSpec(w_qkv.shape, lambda b: (0, 0)),
                pl.BlockSpec(wr.shape, lambda b: (0, 0)),
            ],
            out_specs=pl.BlockSpec((Bt, L, Dout), lambda b: (b, 0, 0)),
        ),
        compiler_params=pltpu.CompilerParams(
            dimension_semantics=("parallel",),
            vmem_limit_bytes=vmem_limit),
    )(x, w_qkv, wr)


def mha_v2_reference(queries, wq_t, wk_t, wv_t, wr_t, *, head_count, dk, dv):
    """Pure-JAX reference mirroring the PyTorch forward (self-attn, no mask)."""
    B, L, _ = queries.shape
    inv_sqrt_d = float(dk) ** (-0.5)
    q_proj = (queries @ wq_t).reshape(B, L, head_count, dk).transpose(0, 2, 1, 3)
    k_proj = (queries @ wk_t).reshape(B, L, head_count, dk).transpose(0, 2, 3, 1)
    v_proj = (queries @ wv_t).reshape(B, L, head_count, dv).transpose(0, 2, 1, 3)
    w = (q_proj @ k_proj) * inv_sqrt_d
    w = jax.nn.softmax(w, axis=-1)
    att = (w @ v_proj).transpose(0, 2, 1, 3).reshape(B, L, head_count * dv)
    return att @ wr_t


if __name__ == "__main__":
    # Module hyperparameters (key_size=value_size=query_size defaults).
    head_count = 4
    query_size = 32
    key_size = query_size
    value_size = key_size
    dk = key_size // head_count          # key_size_per_head = 8
    dv = value_size // head_count        # value_size_per_head = 8
    inv_sqrt_dk = dk ** (-0.5)
    inv_sqrt_dv = dv ** (-0.5)

    key = jax.random.PRNGKey(0)
    k_q, k_wq, k_wk, k_wv, k_wr, k_q2 = jax.random.split(key, 6)

    # Deterministic parameter init matching the module's init_parameters().
    wq_t = jax.random.uniform(k_wq, (query_size, head_count * dk),
                              minval=-inv_sqrt_dk, maxval=inv_sqrt_dk,
                              dtype=jnp.float32)
    wk_t = jax.random.uniform(k_wk, (key_size, head_count * dk),
                              minval=-inv_sqrt_dk, maxval=inv_sqrt_dk,
                              dtype=jnp.float32)
    wv_t = jax.random.uniform(k_wv, (value_size, head_count * dv),
                              minval=-inv_sqrt_dv, maxval=inv_sqrt_dv,
                              dtype=jnp.float32)
    wr_t = jax.random.uniform(k_wr, (head_count * dv, value_size),
                              minval=-inv_sqrt_dv, maxval=inv_sqrt_dv,
                              dtype=jnp.float32)

    # --- test 1: small batch, f32 path ----------------------------------------
    B, L = 2, 8
    queries = jax.random.normal(k_q, (B, L, query_size), dtype=jnp.float32)
    out = mha_v2_forward(queries, wq_t, wk_t, wv_t, wr_t,
                         head_count=head_count, dk=dk, dv=dv)
    out = jax.block_until_ready(out)
    ref = mha_v2_reference(queries, wq_t, wk_t, wv_t, wr_t,
                           head_count=head_count, dk=dk, dv=dv)
    assert out.shape == (B, L, value_size)
    assert jnp.allclose(out, ref, atol=5e-3, rtol=5e-3), "f32 path mismatch"

    # --- test 2: larger batch (Bt>1 per grid step), bf16 projection operands --
    B2, L2 = 8, 8
    queries2 = jax.random.normal(k_q2, (B2, L2, query_size), dtype=jnp.float32)
    out2 = mha_v2_forward(queries2, wq_t, wk_t, wv_t, wr_t,
                          head_count=head_count, dk=dk, dv=dv,
                          compute_dtype=jnp.bfloat16)
    out2 = jax.block_until_ready(out2)
    bf = lambda a: a.astype(jnp.bfloat16).astype(jnp.float32)
    ref2 = mha_v2_reference(bf(queries2), bf(wq_t), bf(wk_t), bf(wv_t), bf(wr_t),
                            head_count=head_count, dk=dk, dv=dv)
    assert out2.shape == (B2, L2, value_size)
    assert jnp.allclose(out2, ref2, atol=3e-2, rtol=3e-2), "bf16 path mismatch"

    print("KERNEL_OK")
</pallas_src>

<mosaic_0001>
module attributes {stable_mosaic.version = 11 : i64} {
  func.func @_mha_kernel(%arg0: i32, %arg1: memref<2x8x32xf32, #tpu.memory_space<vmem>>, %arg2: memref<32x96xf32, #tpu.memory_space<vmem>>, %arg3: memref<32x32xf32, #tpu.memory_space<vmem>>, %arg4: memref<2x8x32xf32, #tpu.memory_space<vmem>>) attributes {dimension_semantics = [#tpu.dimension_semantics<parallel>], iteration_bounds = array<i64: 1>, scalar_prefetch = 0 : i64, scratch_operands = 0 : i64, tpu.core_type = #tpu.core_type<tc>, window_params = [{transform_indices = @transform_0, window_bounds = array<i64: 2, 8, 32>}, {pipeline_mode = #tpu.pipeline_mode<synchronous>, transform_indices = @transform_1, window_bounds = array<i64: 32, 96>}, {pipeline_mode = #tpu.pipeline_mode<synchronous>, transform_indices = @transform_2, window_bounds = array<i64: 32, 32>}, {transform_indices = @transform_3, window_bounds = array<i64: 2, 8, 32>}]} {
    %c0 = arith.constant 0 : index
    %c0_0 = arith.constant 0 : index
    %c0_1 = arith.constant 0 : index
    %0 = vector.load %arg1[%c0, %c0_0, %c0_1] : memref<2x8x32xf32, #tpu.memory_space<vmem>>, vector<2x8x32xf32>
    %1 = vector.shape_cast %0 : vector<2x8x32xf32> to vector<16x32xf32>
    %c0_2 = arith.constant 0 : index
    %c0_3 = arith.constant 0 : index
    %2 = vector.load %arg2[%c0_2, %c0_3] : memref<32x96xf32, #tpu.memory_space<vmem>>, vector<32x96xf32>
    %cst = arith.constant dense<0.000000e+00> : vector<16x96xf32>
    %3 = tpu.matmul %1, %2, %cst {dimension_numbers = #tpu.dot_dimension_numbers<[1], [0], [0], [1], [0, 0, 1, 1], [], []>} : vector<16x32xf32>, vector<32x96xf32>, vector<16x96xf32> -> vector<16x96xf32>
    %4 = vector.extract_strided_slice %3 {offsets = [0, 0], sizes = [16, 32], strides = [1, 1]} : vector<16x96xf32> to vector<16x32xf32>
    %5 = vector.extract_strided_slice %3 {offsets = [0, 32], sizes = [16, 32], strides = [1, 1]} : vector<16x96xf32> to vector<16x32xf32>
    %6 = vector.extract_strided_slice %3 {offsets = [0, 64], sizes = [16, 32], strides = [1, 1]} : vector<16x96xf32> to vector<16x32xf32>
    %7 = vector.extract_strided_slice %4 {offsets = [0, 0], sizes = [16, 8], strides = [1, 1]} : vector<16x32xf32> to vector<16x8xf32>
    %8 = vector.extract_strided_slice %4 {offsets = [0, 8], sizes = [16, 8], strides = [1, 1]} : vector<16x32xf32> to vector<16x8xf32>
    %9 = vector.extract_strided_slice %4 {offsets = [0, 16], sizes = [16, 8], strides = [1, 1]} : vector<16x32xf32> to vector<16x8xf32>
    %10 = vector.extract_strided_slice %4 {offsets = [0, 24], sizes = [16, 8], strides = [1, 1]} : vector<16x32xf32> to vector<16x8xf32>
    %11 = vector.shape_cast %7 : vector<16x8xf32> to vector<1x16x8xf32>
    %12 = vector.shape_cast %8 : vector<16x8xf32> to vector<1x16x8xf32>
    %13 = vector.shape_cast %9 : vector<16x8xf32> to vector<1x16x8xf32>
    %14 = vector.shape_cast %10 : vector<16x8xf32> to vector<1x16x8xf32>
    %15 = tpu.concatenate %11, %12, %13, %14 in 0 : vector<1x16x8xf32>, vector<1x16x8xf32>, vector<1x16x8xf32>, vector<1x16x8xf32> -> vector<4x16x8xf32>
    %16 = vector.shape_cast %15 : vector<4x16x8xf32> to vector<8x8x8xf32>
    %17 = vector.extract_strided_slice %5 {offsets = [0, 0], sizes = [16, 8], strides = [1, 1]} : vector<16x32xf32> to vector<16x8xf32>
    %18 = vector.extract_strided_slice %5 {offsets = [0, 8], sizes = [16, 8], strides = [1, 1]} : vector<16x32xf32> to vector<16x8xf32>
    %19 = vector.extract_strided_slice %5 {offsets = [0, 16], sizes = [16, 8], strides = [1, 1]} : vector<16x32xf32> to vector<16x8xf32>
    %20 = vector.extract_strided_slice %5 {offsets = [0, 24], sizes = [16, 8], strides = [1, 1]} : vector<16x32xf32> to vector<16x8xf32>
    %21 = vector.shape_cast %17 : vector<16x8xf32> to vector<1x16x8xf32>
    %22 = vector.shape_cast %18 : vector<16x8xf32> to vector<1x16x8xf32>
    %23 = vector.shape_cast %19 : vector<16x8xf32> to vector<1x16x8xf32>
    %24 = vector.shape_cast %20 : vector<16x8xf32> to vector<1x16x8xf32>
    %25 = tpu.concatenate %21, %22, %23, %24 in 0 : vector<1x16x8xf32>, vector<1x16x8xf32>, vector<1x16x8xf32>, vector<1x16x8xf32> -> vector<4x16x8xf32>
    %26 = vector.shape_cast %25 : vector<4x16x8xf32> to vector<8x8x8xf32>
    %27 = vector.extract_strided_slice %6 {offsets = [0, 0], sizes = [16, 8], strides = [1, 1]} : vector<16x32xf32> to vector<16x8xf32>
    %28 = vector.extract_strided_slice %6 {offsets = [0, 8], sizes = [16, 8], strides = [1, 1]} : vector<16x32xf32> to vector<16x8xf32>
    %29 = vector.extract_strided_slice %6 {offsets = [0, 16], sizes = [16, 8], strides = [1, 1]} : vector<16x32xf32> to vector<16x8xf32>
    %30 = vector.extract_strided_slice %6 {offsets = [0, 24], sizes = [16, 8], strides = [1, 1]} : vector<16x32xf32> to vector<16x8xf32>
    %31 = vector.shape_cast %27 : vector<16x8xf32> to vector<1x16x8xf32>
    %32 = vector.shape_cast %28 : vector<16x8xf32> to vector<1x16x8xf32>
    %33 = vector.shape_cast %29 : vector<16x8xf32> to vector<1x16x8xf32>
    %34 = vector.shape_cast %30 : vector<16x8xf32> to vector<1x16x8xf32>
    %35 = tpu.concatenate %31, %32, %33, %34 in 0 : vector<1x16x8xf32>, vector<1x16x8xf32>, vector<1x16x8xf32>, vector<1x16x8xf32> -> vector<4x16x8xf32>
    %36 = vector.shape_cast %35 : vector<4x16x8xf32> to vector<8x8x8xf32>
    "tpu.trace_start"() <{level = 10 : i32, message = "gqd,gkd->gqk"}> : () -> ()
    %cst_4 = arith.constant dense<0.000000e+00> : vector<8x8x8xf32>
    %37 = tpu.matmul %16, %26, %cst_4 {dimension_numbers = #tpu.dot_dimension_numbers<[2], [2], [1], [1], [0, 0, 0, 1, 1, 1], [0], [0]>} : vector<8x8x8xf32>, vector<8x8x8xf32>, vector<8x8x8xf32> -> vector<8x8x8xf32>
    "tpu.trace_stop"() : () -> ()
    %cst_5 = arith.constant 0.353553385 : f32
    %38 = vector.broadcast %cst_5 : f32 to vector<8x8x8xf32>
    %39 = arith.mulf %37, %38 : vector<8x8x8xf32>
    %cst_6 = arith.constant dense<0xFF800000> : vector<8x8xf32>
    %40 = vector.multi_reduction <maximumf>, %39, %cst_6 [2] : vector<8x8x8xf32> to vector<8x8xf32>
    %41 = vector.shape_cast %40 : vector<8x8xf32> to vector<8x8x1xf32>
    %42 = vector.broadcast %41 : vector<8x8x1xf32> to vector<8x8x8xf32>
    %43 = arith.subf %39, %42 : vector<8x8x8xf32>
    %44 = math.exp %43 : vector<8x8x8xf32>
    %cst_7 = arith.constant dense<0.000000e+00> : vector<8x8xf32>
    %45 = vector.multi_reduction <add>, %44, %cst_7 [2] : vector<8x8x8xf32> to vector<8x8xf32>
    %46 = vector.shape_cast %45 : vector<8x8xf32> to vector<8x8x1xf32>
    %47 = tpu.reciprocal %46 {approx = true} : vector<8x8x1xf32> -> vector<8x8x1xf32>
    %48 = vector.broadcast %47 : vector<8x8x1xf32> to vector<8x8x8xf32>
    %49 = arith.mulf %44, %48 : vector<8x8x8xf32>
    "tpu.trace_start"() <{level = 10 : i32, message = "gqk,gkd->gqd"}> : () -> ()
    %cst_8 = arith.constant dense<0.000000e+00> : vector<8x8x8xf32>
    %50 = tpu.matmul %49, %36, %cst_8 {dimension_numbers = #tpu.dot_dimension_numbers<[2], [1], [1], [2], [0, 0, 0, 1, 1, 2], [0], [0]>} : vector<8x8x8xf32>, vector<8x8x8xf32>, vector<8x8x8xf32> -> vector<8x8x8xf32>
    "tpu.trace_stop"() : () -> ()
    %51 = vector.shape_cast %50 : vector<8x8x8xf32> to vector<4x16x8xf32>
    %52 = vector.extract_strided_slice %51 {offsets = [0, 0, 0], sizes = [1, 16, 8], strides = [1, 1, 1]} : vector<4x16x8xf32> to vector<1x16x8xf32>
    %53 = vector.shape_cast %52 : vector<1x16x8xf32> to vector<16x8xf32>
    %54 = vector.extract_strided_slice %51 {offsets = [1, 0, 0], sizes = [1, 16, 8], strides = [1, 1, 1]} : vector<4x16x8xf32> to vector<1x16x8xf32>
    %55 = vector.shape_cast %54 : vector<1x16x8xf32> to vector<16x8xf32>
    %56 = vector.extract_strided_slice %51 {offsets = [2, 0, 0], sizes = [1, 16, 8], strides = [1, 1, 1]} : vector<4x16x8xf32> to vector<1x16x8xf32>
    %57 = vector.shape_cast %56 : vector<1x16x8xf32> to vector<16x8xf32>
    %58 = vector.extract_strided_slice %51 {offsets = [3, 0, 0], sizes = [1, 16, 8], strides = [1, 1, 1]} : vector<4x16x8xf32> to vector<1x16x8xf32>
    %59 = vector.shape_cast %58 : vector<1x16x8xf32> to vector<16x8xf32>
    %60 = tpu.concatenate %53, %55, %57, %59 in 1 : vector<16x8xf32>, vector<16x8xf32>, vector<16x8xf32>, vector<16x8xf32> -> vector<16x32xf32>
    %c0_9 = arith.constant 0 : index
    %c0_10 = arith.constant 0 : index
    %61 = vector.load %arg3[%c0_9, %c0_10] : memref<32x32xf32, #tpu.memory_space<vmem>>, vector<32x32xf32>
    %cst_11 = arith.constant dense<0.000000e+00> : vector<16x32xf32>
    %62 = tpu.matmul %60, %61, %cst_11 {dimension_numbers = #tpu.dot_dimension_numbers<[1], [0], [0], [1], [0, 0, 1, 1], [], []>} : vector<16x32xf32>, vector<32x32xf32>, vector<16x32xf32> -> vector<16x32xf32>
    %63 = vector.shape_cast %62 : vector<16x32xf32> to vector<2x8x32xf32>
    %c0_12 = arith.constant 0 : index
    %c0_13 = arith.constant 0 : index
    %c0_14 = arith.constant 0 : index
    %64 = vector.load %arg4[%c0_12, %c0_13, %c0_14] : memref<2x8x32xf32, #tpu.memory_space<vmem>>, vector<2x8x32xf32>
    tpu.vector_store %arg4[%c0_12, %c0_13, %c0_14], %63 {strides = array<i32>} : memref<2x8x32xf32, #tpu.memory_space<vmem>>, vector<2x8x32xf32>,
    return
  }
  func.func @transform_0(%arg0: i32) -> (i32, i32, i32) {
    %c0_i32 = arith.constant 0 : i32
    %c0_i32_0 = arith.constant 0 : i32
    %c0_i32_1 = arith.constant 0 : i32
    return %arg0, %c0_i32, %c0_i32_0 : i32, i32, i32
  }
  func.func @transform_1(%arg0: i32) -> (i32, i32) {
    %c0_i32 = arith.constant 0 : i32
    %c0_i32_0 = arith.constant 0 : i32
    %c0_i32_1 = arith.constant 0 : i32
    return %c0_i32, %c0_i32_0 : i32, i32
  }
  func.func @transform_2(%arg0: i32) -> (i32, i32) {
    %c0_i32 = arith.constant 0 : i32
    %c0_i32_0 = arith.constant 0 : i32
    %c0_i32_1 = arith.constant 0 : i32
    return %c0_i32, %c0_i32_0 : i32, i32
  }
  func.func @transform_3(%arg0: i32) -> (i32, i32, i32) {
    %c0_i32 = arith.constant 0 : i32
    %c0_i32_0 = arith.constant 0 : i32
    %c0_i32_1 = arith.constant 0 : i32
    return %arg0, %c0_i32, %c0_i32_0 : i32, i32, i32
  }
}

</mosaic_0001>

<llo_original>
// kernel: tpu_custom_call.1
$region0: #{tpu_custom_call.1}
  #allocation0 [shape = 'u32[]', space=smem, size = 0x4, offset = 0x4, fixed_abs, tag = 'smem constant byte address 0x4 - core index']
  #allocation1 [shape = 'u32[144,128]{1,0:T(1,128)}', space=vmem, size = 0x12000, scoped, tag = 'internal scratch']
  %s0 = inlined_call_operand.hbm [shape: f32[2,8,32], index: 0, kind: input, shape index: {}]
  %s1 = inlined_call_operand.hbm [shape: f32[32,96], index: 1, kind: input, shape index: {}]
  %s2 = inlined_call_operand.hbm [shape: f32[32,32], index: 2, kind: input, shape index: {}]
  %s3 = inlined_call_operand.hbm [shape: f32[2,8,32], index: 3, kind: output, shape index: {}]
  %s4 = sld [smem:[#allocation0]]
  $region34: #{tpu_custom_call.1} parent=0
    _
  %s6 = ssub.s32 1, %s4
  %s7 = scalar_select 0, %s6, %s4
  $region1: #{tpu_custom_call.1} parent=0
    #allocation2 [shape = 'u8[8192]{0}', space=vmem, size = 0x2000, scoped, tag = 'input window, operand 0, single buffered']
    #allocation3 [shape = 's32[1]{0}', space=sflag, size = 0x4, scoped, tag = 'scoped memory for tpu_custom_call.1']
    #allocation4 [shape = 's32[1]{0}', space=sflag, size = 0x4, scoped, tag = 'scoped memory for tpu_custom_call.1']
    #allocation5 [shape = 'u8[16384]{0}', space=vmem, size = 0x4000, scoped, tag = 'input window, operand 1, single buffered']
    #allocation6 [shape = 's32[1]{0}', space=sflag, size = 0x4, scoped, tag = 'scoped memory for tpu_custom_call.1']
    #allocation7 [shape = 'u8[16384]{0}', space=vmem, size = 0x4000, scoped, tag = 'input window, operand 2, single buffered']
    #allocation8 [shape = 'u8[8192]{0}', space=vmem, size = 0x2000, scoped, tag = 'output window, operand 0, single buffered']
    %8 = vsyncpa [#allocation3], 0
    %9 = vsyncpa [#allocation6], 0
    %10 = vsyncpa [#allocation4], 0
    // Predicated region
    $region2: #{tpu_custom_call.1} parent=1 // pred_check
      _
    $region3: #{tpu_custom_call.1} parent=1 // pred_check_branch
      %12 = sbr.rel (0) target = $region5
    $region4: #{tpu_custom_call.1} parent=1 // pred_region
      %s14 = ssub.s32 256, 256
      %15 = vsyncadd [#allocation3], %s14
      %s16 = sshll.u32 [#allocation2], 4
      %s17 = int_to_ptr.vmem [resolvable:$true] %s16
      %22 = dma.hbm_to_vmem [thread:$0]  %s0, 256, %s17, [#allocation3], 128, 128, 8
    $region5: #{tpu_custom_call.1} parent=1 // pred_fallthru
      _
    // Predicated region
    $region6: #{tpu_custom_call.1} parent=1 // pred_check
      _
    $region7: #{tpu_custom_call.1} parent=1 // pred_check_branch
      %24 = sbr.rel (0) target = $region9
    $region8: #{tpu_custom_call.1} parent=1 // pred_region
      %s26 = ssub.s32 512, 512
      %27 = vsyncadd [#allocation6], %s26
      %s28 = sshll.u32 [#allocation5], 4
      %s29 = int_to_ptr.vmem [resolvable:$true] %s28
      %34 = dma.hbm_to_vmem [thread:$0]  %s1, 512, %s29, [#allocation6], 128, 128, 8
    $region9: #{tpu_custom_call.1} parent=1 // pred_fallthru
      _
    // Predicated region
    $region10: #{tpu_custom_call.1} parent=1 // pred_check
      _
    $region11: #{tpu_custom_call.1} parent=1 // pred_check_branch
      %36 = sbr.rel (0) target = $region13
    $region12: #{tpu_custom_call.1} parent=1 // pred_region
      %s38 = ssub.s32 512, 512
      %39 = vsyncadd [#allocation6], %s38
      %s40 = sshll.u32 [#allocation7], 4
      %s41 = int_to_ptr.vmem [resolvable:$true] %s40
      %46 = dma.hbm_to_vmem [thread:$0]  %s2, 512, %s41, [#allocation6], 128, 128, 8
    $region13: #{tpu_custom_call.1} parent=1 // pred_fallthru
      _
    // Predicated region
    $region14: #{tpu_custom_call.1} parent=1 // pred_check
      _
    $region15: #{tpu_custom_call.1} parent=1 // pred_check_branch
      %48 = sbr.rel (0) target = $region17
    $region16: #{tpu_custom_call.1} parent=1 // pred_region
      %49 = dma.done [#allocation3], 256
    $region17: #{tpu_custom_call.1} parent=1 // pred_fallthru
      _
    // Predicated region
    $region18: #{tpu_custom_call.1} parent=1 // pred_check
      _
    $region19: #{tpu_custom_call.1} parent=1 // pred_check_branch
      %51 = sbr.rel (0) target = $region21
    $region20: #{tpu_custom_call.1} parent=1 // pred_region
      %52 = dma.done [#allocation6], 512
    $region21: #{tpu_custom_call.1} parent=1 // pred_fallthru
      _
    // Predicated region
    $region22: #{tpu_custom_call.1} parent=1 // pred_check
      _
    $region23: #{tpu_custom_call.1} parent=1 // pred_check_branch
      %54 = sbr.rel (0) target = $region25
    $region24: #{tpu_custom_call.1} parent=1 // pred_region
      %55 = dma.done [#allocation6], 512
    $region25: #{tpu_custom_call.1} parent=1 // pred_fallthru
      _
    %v56 = vld [vmem:[#allocation2] sm:$0xff]
    %v57 = vld [vmem:[#allocation2 + $0x8] sm:$0xff]
    %v58 = vld [vmem:[#allocation5] sm:$0xff]
    %v59 = vld [vmem:[#allocation5 + $0x8] sm:$0xff]
    %v60 = vld [vmem:[#allocation5 + $0x10] sm:$0xff]
    %v61 = vld [vmem:[#allocation5 + $0x18] sm:$0xff]
    %vm62 = vcmask 261120
    %v64 = vsel %vm62, %v56, 0
    %v67 = vsel %vm62, %v57, 0
    %69 = vmatprep.subr.mxu0 0.0
    %70 = vmatpush1.msra.mxu0 0.0
    %71 = vmatprep.subr.mxu0 0.0
    %72 = vmatpush1.msra.mxu0 0.0
    %73 = vmatprep.subr.mxu0 0.0
    %74 = vmatpush1.msra.mxu0 0.0
    %75 = vmatprep.subr.mxu0 0.0
    %76 = vmatpush1.msra.mxu0 0.0
    %77 = vmatprep.subr.mxu0 0.0
    %78 = vmatpush1.msra.mxu0 0.0
    %79 = vmatprep.subr.mxu0 0.0
    %80 = vmatpush1.msra.mxu0 0.0
    %81 = vmatprep.subr.mxu0 0.0
    %82 = vmatpush1.msra.mxu0 0.0
    %83 = vmatprep.subr.mxu0 0.0
    %84 = vmatpush1.msra.mxu0 0.0
    %85 = vmatprep.subr.mxu0 0.0
    %86 = vmatpush1.msra.mxu0 0.0
    %87 = vmatprep.subr.mxu0 0.0
    %88 = vmatpush1.msra.mxu0 0.0
    %89 = vmatprep.subr.mxu0 0.0
    %90 = vmatpush1.msra.mxu0 0.0
    %91 = vmatprep.subr.mxu0 0.0
    %92 = vmatpush1.msra.mxu0 0.0
    %93 = vmatprep.subr.mxu0 0.0
    %94 = vmatpush1.msra.mxu0 %v61
    %95 = vmatprep.subr.mxu0 0.0
    %96 = vmatpush1.msra.mxu0 %v60
    %97 = vmatprep.subr.mxu0 0.0
    %98 = vmatpush1.msra.mxu0 %v59
    %99 = vmatprep.subr.mxu0 0.0
    %100 = vmatpush1.msra.mxu0 %v58
    %101 = vmatprep.subr.mxu0 0.0
    %102 = vmatpush2.msra.mxu0 0.0
    %103 = vmatprep.subr.mxu0 0.0
    %104 = vmatpush2.msra.mxu0 0.0
    %105 = vmatprep.subr.mxu0 0.0
    %106 = vmatpush2.msra.mxu0 0.0
    %107 = vmatprep.subr.mxu0 0.0
    %108 = vmatpush2.msra.mxu0 0.0
    %109 = vmatprep.subr.mxu0 0.0
    %110 = vmatpush2.msra.mxu0 0.0
    %111 = vmatprep.subr.mxu0 0.0
    %112 = vmatpush2.msra.mxu0 0.0
    %113 = vmatprep.subr.mxu0 0.0
    %114 = vmatpush2.msra.mxu0 0.0
    %115 = vmatprep.subr.mxu0 0.0
    %116 = vmatpush2.msra.mxu0 0.0
    %117 = vmatprep.subr.mxu0 0.0
    %118 = vmatpush2.msra.mxu0 0.0
    %119 = vmatprep.subr.mxu0 0.0
    %120 = vmatpush2.msra.mxu0 0.0
    %121 = vmatprep.subr.mxu0 0.0
    %122 = vmatpush2.msra.mxu0 0.0
    %123 = vmatprep.subr.mxu0 0.0
    %124 = vmatpush2.msra.mxu0 0.0
    %125 = vmatprep.subr.mxu0 0.0
    %126 = vmatpush2.msra.mxu0 0.0
    %127 = vmatprep.subr.mxu0 0.0
    %128 = vmatpush2.msra.mxu0 0.0
    %129 = vmatprep.subr.mxu0 0.0
    %130 = vmatpush2.msra.mxu0 0.0
    %131 = vmatprep.subr.mxu0 0.0
    %132 = vmatpush2.msra.mxu0 0.0
    %133 = vmatprep.mubr.f32.mxu0 0.0
    %134 = vmatmul.mubr.f32.gmra.mxu0 %v64
    %v135 = vpop.f32.mrf.mxu0
    %v136 = vadd.f32 0.0, %v135
    %v137 = vpop.f32.mrf.mxu0
    %138 = vmatprep.mubr.f32.mxu0 0.0
    %139 = vmatmul.mubr.f32.gmra.mxu0 %v67
    %v140 = vpop.f32.mrf.mxu0
    %v141 = vadd.f32 0.0, %v140
    %v142 = vpop.f32.mrf.mxu0
    %143 = vdwg.mxu0
    %146 = vrot.lane.b32.xlu0 %v136, 120
    %v147 = vpop.permute.xlu0 %146
    %148 = vrot.lane.b32.xlu0 %v141, 120
    %v149 = vpop.permute.xlu0 %148
    %150 = vrot.lane.b32.xlu0 %v136, 112
    %v151 = vpop.permute.xlu0 %150
    %152 = vrot.lane.b32.xlu0 %v141, 112
    %v153 = vpop.permute.xlu0 %152
    %154 = vrot.lane.b32.xlu0 %v136, 104
    %v155 = vpop.permute.xlu0 %154
    %156 = vrot.lane.b32.xlu0 %v141, 104
    %v157 = vpop.permute.xlu0 %156
    %158 = vrot.lane.b32.xlu0 %v136, 96
    %v159 = vpop.permute.xlu0 %158
    %vm160 = vcmask 64512
    %v161 = vsel %vm160, %v136, 0
    %v163 = vsel %vm160, %v159, 0
    %165 = vmatprep.subr.mxu0 0.0
    %166 = vmatpush1.xpose.msra.mxu0 0.0
    %167 = vmatprep.subr.mxu0 0.0
    %168 = vmatpush1.xpose.msra.mxu0 0.0
    %169 = vmatprep.subr.mxu0 0.0
    %170 = vmatpush1.xpose.msra.mxu0 0.0
    %171 = vmatprep.subr.mxu0 0.0
    %172 = vmatpush1.xpose.msra.mxu0 0.0
    %173 = vmatprep.subr.mxu0 0.0
    %174 = vmatpush1.xpose.msra.mxu0 0.0
    %175 = vmatprep.subr.mxu0 0.0
    %176 = vmatpush1.xpose.msra.mxu0 0.0
    %177 = vmatprep.subr.mxu0 0.0
    %178 = vmatpush1.xpose.msra.mxu0 0.0
    %179 = vmatprep.subr.mxu0 0.0
    %180 = vmatpush1.xpose.msra.mxu0 0.0
    %181 = vmatprep.subr.mxu0 0.0
    %182 = vmatpush1.xpose.msra.mxu0 0.0
    %183 = vmatprep.subr.mxu0 0.0
    %184 = vmatpush1.xpose.msra.mxu0 0.0
    %185 = vmatprep.subr.mxu0 0.0
    %186 = vmatpush1.xpose.msra.mxu0 0.0
    %187 = vmatprep.subr.mxu0 0.0
    %188 = vmatpush1.xpose.msra.mxu0 0.0
    %189 = vmatprep.subr.mxu0 0.0
    %190 = vmatpush1.xpose.msra.mxu0 0.0
    %191 = vmatprep.subr.mxu0 0.0
    %192 = vmatpush1.xpose.msra.mxu0 0.0
    %193 = vmatprep.subr.mxu0 0.0
    %194 = vmatpush1.xpose.msra.mxu0 0.0
    %195 = vmatprep.subr.mxu0 0.0
    %196 = vmatpush1.xpose.msra.mxu0 %v163
    %197 = vmatprep.subr.mxu0 0.0
    %198 = vmatpush2.xpose.msra.mxu0 0.0
    %199 = vmatprep.subr.mxu0 0.0
    %200 = vmatpush2.xpose.msra.mxu0 0.0
    %201 = vmatprep.subr.mxu0 0.0
    %202 = vmatpush2.xpose.msra.mxu0 0.0
    %203 = vmatprep.subr.mxu0 0.0
    %204 = vmatpush2.xpose.msra.mxu0 0.0
    %205 = vmatprep.subr.mxu0 0.0
    %206 = vmatpush2.xpose.msra.mxu0 0.0
    %207 = vmatprep.subr.mxu0 0.0
    %208 = vmatpush2.xpose.msra.mxu0 0.0
    %209 = vmatprep.subr.mxu0 0.0
    %210 = vmatpush2.xpose.msra.mxu0 0.0
    %211 = vmatprep.subr.mxu0 0.0
    %212 = vmatpush2.xpose.msra.mxu0 0.0
    %213 = vmatprep.subr.mxu0 0.0
    %214 = vmatpush2.xpose.msra.mxu0 0.0
    %215 = vmatprep.subr.mxu0 0.0
    %216 = vmatpush2.xpose.msra.mxu0 0.0
    %217 = vmatprep.subr.mxu0 0.0
    %218 = vmatpush2.xpose.msra.mxu0 0.0
    %219 = vmatprep.subr.mxu0 0.0
    %220 = vmatpush2.xpose.msra.mxu0 0.0
    %221 = vmatprep.subr.mxu0 0.0
    %222 = vmatpush2.xpose.msra.mxu0 0.0
    %223 = vmatprep.subr.mxu0 0.0
    %224 = vmatpush2.xpose.msra.mxu0 0.0
    %225 = vmatprep.subr.mxu0 0.0
    %226 = vmatpush2.xpose.msra.mxu0 0.0
    %227 = vmatprep.subr.mxu0 0.0
    %228 = vmatpush2.xpose.msra.mxu0 0.0
    %229 = vmatprep.mubr.f32.mxu0 0.0
    %230 = vmatmul.mubr.f32.gmra.mxu0 %v161
    %v231 = vpop.f32.mrf.mxu0
    %v232 = vadd.f32 0.0, %v231
    %v233 = vpop.f32.mrf.mxu0
    %234 = vdwg.mxu0
    %235 = vrot.lane.b32.xlu0 %v141, 96
    %v236 = vpop.permute.xlu0 %235
    %v237 = vsel %vm160, %v141, 0
    %v239 = vsel %vm160, %v236, 0
    %241 = vmatprep.subr.mxu0 0.0
    %242 = vmatpush1.xpose.msra.mxu0 0.0
    %243 = vmatprep.subr.mxu0 0.0
    %244 = vmatpush1.xpose.msra.mxu0 0.0
    %245 = vmatprep.subr.mxu0 0.0
    %246 = vmatpush1.xpose.msra.mxu0 0.0
    %247 = vmatprep.subr.mxu0 0.0
    %248 = vmatpush1.xpose.msra.mxu0 0.0
    %249 = vmatprep.subr.mxu0 0.0
    %250 = vmatpush1.xpose.msra.mxu0 0.0
    %251 = vmatprep.subr.mxu0 0.0
    %252 = vmatpush1.xpose.msra.mxu0 0.0
    %253 = vmatprep.subr.mxu0 0.0
    %254 = vmatpush1.xpose.msra.mxu0 0.0
    %255 = vmatprep.subr.mxu0 0.0
    %256 = vmatpush1.xpose.msra.mxu0 0.0
    %257 = vmatprep.subr.mxu0 0.0
    %258 = vmatpush1.xpose.msra.mxu0 0.0
    %259 = vmatprep.subr.mxu0 0.0
    %260 = vmatpush1.xpose.msra.mxu0 0.0
    %261 = vmatprep.subr.mxu0 0.0
    %262 = vmatpush1.xpose.msra.mxu0 0.0
    %263 = vmatprep.subr.mxu0 0.0
    %264 = vmatpush1.xpose.msra.mxu0 0.0
    %265 = vmatprep.subr.mxu0 0.0
    %266 = vmatpush1.xpose.msra.mxu0 0.0
    %267 = vmatprep.subr.mxu0 0.0
    %268 = vmatpush1.xpose.msra.mxu0 0.0
    %269 = vmatprep.subr.mxu0 0.0
    %270 = vmatpush1.xpose.msra.mxu0 0.0
    %271 = vmatprep.subr.mxu0 0.0
    %272 = vmatpush1.xpose.msra.mxu0 %v239
    %273 = vmatprep.subr.mxu0 0.0
    %274 = vmatpush2.xpose.msra.mxu0 0.0
    %275 = vmatprep.subr.mxu0 0.0
    %276 = vmatpush2.xpose.msra.mxu0 0.0
    %277 = vmatprep.subr.mxu0 0.0
    %278 = vmatpush2.xpose.msra.mxu0 0.0
    %279 = vmatprep.subr.mxu0 0.0
    %280 = vmatpush2.xpose.msra.mxu0 0.0
    %281 = vmatprep.subr.mxu0 0.0
    %282 = vmatpush2.xpose.msra.mxu0 0.0
    %283 = vmatprep.subr.mxu0 0.0
    %284 = vmatpush2.xpose.msra.mxu0 0.0
    %285 = vmatprep.subr.mxu0 0.0
    %286 = vmatpush2.xpose.msra.mxu0 0.0
    %287 = vmatprep.subr.mxu0 0.0
    %288 = vmatpush2.xpose.msra.mxu0 0.0
    %289 = vmatprep.subr.mxu0 0.0
    %290 = vmatpush2.xpose.msra.mxu0 0.0
    %291 = vmatprep.subr.mxu0 0.0
    %292 = vmatpush2.xpose.msra.mxu0 0.0
    %293 = vmatprep.subr.mxu0 0.0
    %294 = vmatpush2.xpose.msra.mxu0 0.0
    %295 = vmatprep.subr.mxu0 0.0
    %296 = vmatpush2.xpose.msra.mxu0 0.0
    %297 = vmatprep.subr.mxu0 0.0
    %298 = vmatpush2.xpose.msra.mxu0 0.0
    %299 = vmatprep.subr.mxu0 0.0
    %300 = vmatpush2.xpose.msra.mxu0 0.0
    %301 = vmatprep.subr.mxu0 0.0
    %302 = vmatpush2.xpose.msra.mxu0 0.0
    %303 = vmatprep.subr.mxu0 0.0
    %304 = vmatpush2.xpose.msra.mxu0 0.0
    %305 = vmatprep.mubr.f32.mxu0 0.0
    %306 = vmatmul.mubr.f32.gmra.mxu0 %v237
    %v307 = vpop.f32.mrf.mxu0
    %v308 = vadd.f32 0.0, %v307
    %v309 = vpop.f32.mrf.mxu0
    %310 = vdwg.mxu0
    %311 = vrot.lane.b32.xlu0 %v147, 96
    %v312 = vpop.permute.xlu0 %311
    %v313 = vsel %vm160, %v147, 0
    %v315 = vsel %vm160, %v312, 0
    %317 = vmatprep.subr.mxu0 0.0
    %318 = vmatpush1.xpose.msra.mxu0 0.0
    %319 = vmatprep.subr.mxu0 0.0
    %320 = vmatpush1.xpose.msra.mxu0 0.0
    %321 = vmatprep.subr.mxu0 0.0
    %322 = vmatpush1.xpose.msra.mxu0 0.0
    %323 = vmatprep.subr.mxu0 0.0
    %324 = vmatpush1.xpose.msra.mxu0 0.0
    %325 = vmatprep.subr.mxu0 0.0
    %326 = vmatpush1.xpose.msra.mxu0 0.0
    %327 = vmatprep.subr.mxu0 0.0
    %328 = vmatpush1.xpose.msra.mxu0 0.0
    %329 = vmatprep.subr.mxu0 0.0
    %330 = vmatpush1.xpose.msra.mxu0 0.0
    %331 = vmatprep.subr.mxu0 0.0
    %332 = vmatpush1.xpose.msra.mxu0 0.0
    %333 = vmatprep.subr.mxu0 0.0
    %334 = vmatpush1.xpose.msra.mxu0 0.0
    %335 = vmatprep.subr.mxu0 0.0
    %336 = vmatpush1.xpose.msra.mxu0 0.0
    %337 = vmatprep.subr.mxu0 0.0
    %338 = vmatpush1.xpose.msra.mxu0 0.0
    %339 = vmatprep.subr.mxu0 0.0
    %340 = vmatpush1.xpose.msra.mxu0 0.0
    %341 = vmatprep.subr.mxu0 0.0
    %342 = vmatpush1.xpose.msra.mxu0 0.0
    %343 = vmatprep.subr.mxu0 0.0
    %344 = vmatpush1.xpose.msra.mxu0 0.0
    %345 = vmatprep.subr.mxu0 0.0
    %346 = vmatpush1.xpose.msra.mxu0 0.0
    %347 = vmatprep.subr.mxu0 0.0
    %348 = vmatpush1.xpose.msra.mxu0 %v315
    %349 = vmatprep.subr.mxu0 0.0
    %350 = vmatpush2.xpose.msra.mxu0 0.0
    %351 = vmatprep.subr.mxu0 0.0
    %352 = vmatpush2.xpose.msra.mxu0 0.0
    %353 = vmatprep.subr.mxu0 0.0
    %354 = vmatpush2.xpose.msra.mxu0 0.0
    %355 = vmatprep.subr.mxu0 0.0
    %356 = vmatpush2.xpose.msra.mxu0 0.0
    %357 = vmatprep.subr.mxu0 0.0
    %358 = vmatpush2.xpose.msra.mxu0 0.0
    %359 = vmatprep.subr.mxu0 0.0
    %360 = vmatpush2.xpose.msra.mxu0 0.0
    %361 = vmatprep.subr.mxu0 0.0
    %362 = vmatpush2.xpose.msra.mxu0 0.0
    %363 = vmatprep.subr.mxu0 0.0
    %364 = vmatpush2.xpose.msra.mxu0 0.0
    %365 = vmatprep.subr.mxu0 0.0
    %366 = vmatpush2.xpose.msra.mxu0 0.0
    %367 = vmatprep.subr.mxu0 0.0
    %368 = vmatpush2.xpose.msra.mxu0 0.0
    %369 = vmatprep.subr.mxu0 0.0
    %370 = vmatpush2.xpose.msra.mxu0 0.0
    %371 = vmatprep.subr.mxu0 0.0
    %372 = vmatpush2.xpose.msra.mxu0 0.0
    %373 = vmatprep.subr.mxu0 0.0
    %374 = vmatpush2.xpose.msra.mxu0 0.0
    %375 = vmatprep.subr.mxu0 0.0
    %376 = vmatpush2.xpose.msra.mxu0 0.0
    %377 = vmatprep.subr.mxu0 0.0
    %378 = vmatpush2.xpose.msra.mxu0 0.0
    %379 = vmatprep.subr.mxu0 0.0
    %380 = vmatpush2.xpose.msra.mxu0 0.0
    %381 = vmatprep.mubr.f32.mxu0 0.0
    %382 = vmatmul.mubr.f32.gmra.mxu0 %v313
    %v383 = vpop.f32.mrf.mxu0
    %v384 = vadd.f32 0.0, %v383
    %v385 = vpop.f32.mrf.mxu0
    %386 = vdwg.mxu0
    %387 = vrot.lane.b32.xlu0 %v149, 96
    %v388 = vpop.permute.xlu0 %387
    %v389 = vsel %vm160, %v149, 0
    %v391 = vsel %vm160, %v388, 0
    %393 = vmatprep.subr.mxu0 0.0
    %394 = vmatpush1.xpose.msra.mxu0 0.0
    %395 = vmatprep.subr.mxu0 0.0
    %396 = vmatpush1.xpose.msra.mxu0 0.0
    %397 = vmatprep.subr.mxu0 0.0
    %398 = vmatpush1.xpose.msra.mxu0 0.0
    %399 = vmatprep.subr.mxu0 0.0
    %400 = vmatpush1.xpose.msra.mxu0 0.0
    %401 = vmatprep.subr.mxu0 0.0
    %402 = vmatpush1.xpose.msra.mxu0 0.0
    %403 = vmatprep.subr.mxu0 0.0
    %404 = vmatpush1.xpose.msra.mxu0 0.0
    %405 = vmatprep.subr.mxu0 0.0
    %406 = vmatpush1.xpose.msra.mxu0 0.0
    %407 = vmatprep.subr.mxu0 0.0
    %408 = vmatpush1.xpose.msra.mxu0 0.0
    %409 = vmatprep.subr.mxu0 0.0
    %410 = vmatpush1.xpose.msra.mxu0 0.0
    %411 = vmatprep.subr.mxu0 0.0
    %412 = vmatpush1.xpose.msra.mxu0 0.0
    %413 = vmatprep.subr.mxu0 0.0
    %414 = vmatpush1.xpose.msra.mxu0 0.0
    %415 = vmatprep.subr.mxu0 0.0
    %416 = vmatpush1.xpose.msra.mxu0 0.0
    %417 = vmatprep.subr.mxu0 0.0
    %418 = vmatpush1.xpose.msra.mxu0 0.0
    %419 = vmatprep.subr.mxu0 0.0
    %420 = vmatpush1.xpose.msra.mxu0 0.0
    %421 = vmatprep.subr.mxu0 0.0
    %422 = vmatpush1.xpose.msra.mxu0 0.0
    %423 = vmatprep.subr.mxu0 0.0
    %424 = vmatpush1.xpose.msra.mxu0 %v391
    %425 = vmatprep.subr.mxu0 0.0
    %426 = vmatpush2.xpose.msra.mxu0 0.0
    %427 = vmatprep.subr.mxu0 0.0
    %428 = vmatpush2.xpose.msra.mxu0 0.0
    %429 = vmatprep.subr.mxu0 0.0
    %430 = vmatpush2.xpose.msra.mxu0 0.0
    %431 = vmatprep.subr.mxu0 0.0
    %432 = vmatpush2.xpose.msra.mxu0 0.0
    %433 = vmatprep.subr.mxu0 0.0
    %434 = vmatpush2.xpose.msra.mxu0 0.0
    %435 = vmatprep.subr.mxu0 0.0
    %436 = vmatpush2.xpose.msra.mxu0 0.0
    %437 = vmatprep.subr.mxu0 0.0
    %438 = vmatpush2.xpose.msra.mxu0 0.0
    %439 = vmatprep.subr.mxu0 0.0
    %440 = vmatpush2.xpose.msra.mxu0 0.0
    %441 = vmatprep.subr.mxu0 0.0
    %442 = vmatpush2.xpose.msra.mxu0 0.0
    %443 = vmatprep.subr.mxu0 0.0
    %444 = vmatpush2.xpose.msra.mxu0 0.0
    %445 = vmatprep.subr.mxu0 0.0
    %446 = vmatpush2.xpose.msra.mxu0 0.0
    %447 = vmatprep.subr.mxu0 0.0
    %448 = vmatpush2.xpose.msra.mxu0 0.0
    %449 = vmatprep.subr.mxu0 0.0
    %450 = vmatpush2.xpose.msra.mxu0 0.0
    %451 = vmatprep.subr.mxu0 0.0
    %452 = vmatpush2.xpose.msra.mxu0 0.0
    %453 = vmatprep.subr.mxu0 0.0
    %454 = vmatpush2.xpose.msra.mxu0 0.0
    %455 = vmatprep.subr.mxu0 0.0
    %456 = vmatpush2.xpose.msra.mxu0 0.0
    %457 = vmatprep.mubr.f32.mxu0 0.0
    %458 = vmatmul.mubr.f32.gmra.mxu0 %v389
    %v459 = vpop.f32.mrf.mxu0
    %v460 = vadd.f32 0.0, %v459
    %v461 = vpop.f32.mrf.mxu0
    %462 = vdwg.mxu0
    %463 = vrot.lane.b32.xlu0 %v151, 96
    %v464 = vpop.permute.xlu0 %463
    %v465 = vsel %vm160, %v151, 0
    %v467 = vsel %vm160, %v464, 0
    %469 = vmatprep.subr.mxu0 0.0
    %470 = vmatpush1.xpose.msra.mxu0 0.0
    %471 = vmatprep.subr.mxu0 0.0
    %472 = vmatpush1.xpose.msra.mxu0 0.0
    %473 = vmatprep.subr.mxu0 0.0
    %474 = vmatpush1.xpose.msra.mxu0 0.0
    %475 = vmatprep.subr.mxu0 0.0
    %476 = vmatpush1.xpose.msra.mxu0 0.0
    %477 = vmatprep.subr.mxu0 0.0
    %478 = vmatpush1.xpose.msra.mxu0 0.0
    %479 = vmatprep.subr.mxu0 0.0
    %480 = vmatpush1.xpose.msra.mxu0 0.0
    %481 = vmatprep.subr.mxu0 0.0
    %482 = vmatpush1.xpose.msra.mxu0 0.0
    %483 = vmatprep.subr.mxu0 0.0
    %484 = vmatpush1.xpose.msra.mxu0 0.0
    %485 = vmatprep.subr.mxu0 0.0
    %486 = vmatpush1.xpose.msra.mxu0 0.0
    %487 = vmatprep.subr.mxu0 0.0
    %488 = vmatpush1.xpose.msra.mxu0 0.0
    %489 = vmatprep.subr.mxu0 0.0
    %490 = vmatpush1.xpose.msra.mxu0 0.0
    %491 = vmatprep.subr.mxu0 0.0
    %492 = vmatpush1.xpose.msra.mxu0 0.0
    %493 = vmatprep.subr.mxu0 0.0
    %494 = vmatpush1.xpose.msra.mxu0 0.0
    %495 = vmatprep.subr.mxu0 0.0
    %496 = vmatpush1.xpose.msra.mxu0 0.0
    %497 = vmatprep.subr.mxu0 0.0
    %498 = vmatpush1.xpose.msra.mxu0 0.0
    %499 = vmatprep.subr.mxu0 0.0
    %500 = vmatpush1.xpose.msra.mxu0 %v467
    %501 = vmatprep.subr.mxu0 0.0
    %502 = vmatpush2.xpose.msra.mxu0 0.0
    %503 = vmatprep.subr.mxu0 0.0
    %504 = vmatpush2.xpose.msra.mxu0 0.0
    %505 = vmatprep.subr.mxu0 0.0
    %506 = vmatpush2.xpose.msra.mxu0 0.0
    %507 = vmatprep.subr.mxu0 0.0
    %508 = vmatpush2.xpose.msra.mxu0 0.0
    %509 = vmatprep.subr.mxu0 0.0
    %510 = vmatpush2.xpose.msra.mxu0 0.0
    %511 = vmatprep.subr.mxu0 0.0
    %512 = vmatpush2.xpose.msra.mxu0 0.0
    %513 = vmatprep.subr.mxu0 0.0
    %514 = vmatpush2.xpose.msra.mxu0 0.0
    %515 = vmatprep.subr.mxu0 0.0
    %516 = vmatpush2.xpose.msra.mxu0 0.0
    %517 = vmatprep.subr.mxu0 0.0
    %518 = vmatpush2.xpose.msra.mxu0 0.0
    %519 = vmatprep.subr.mxu0 0.0
    %520 = vmatpush2.xpose.msra.mxu0 0.0
    %521 = vmatprep.subr.mxu0 0.0
    %522 = vmatpush2.xpose.msra.mxu0 0.0
    %523 = vmatprep.subr.mxu0 0.0
    %524 = vmatpush2.xpose.msra.mxu0 0.0
    %525 = vmatprep.subr.mxu0 0.0
    %526 = vmatpush2.xpose.msra.mxu0 0.0
    %527 = vmatprep.subr.mxu0 0.0
    %528 = vmatpush2.xpose.msra.mxu0 0.0
    %529 = vmatprep.subr.mxu0 0.0
    %530 = vmatpush2.xpose.msra.mxu0 0.0
    %531 = vmatprep.subr.mxu0 0.0
    %532 = vmatpush2.xpose.msra.mxu0 0.0
    %533 = vmatprep.mubr.f32.mxu0 0.0
    %534 = vmatmul.mubr.f32.gmra.mxu0 %v465
    %v535 = vpop.f32.mrf.mxu0
    %v536 = vadd.f32 0.0, %v535
    %v537 = vpop.f32.mrf.mxu0
    %538 = vdwg.mxu0
    %539 = vrot.lane.b32.xlu0 %v153, 96
    %v540 = vpop.permute.xlu0 %539
    %v541 = vsel %vm160, %v153, 0
    %v543 = vsel %vm160, %v540, 0
    %545 = vmatprep.subr.mxu0 0.0
    %546 = vmatpush1.xpose.msra.mxu0 0.0
    %547 = vmatprep.subr.mxu0 0.0
    %548 = vmatpush1.xpose.msra.mxu0 0.0
    %549 = vmatprep.subr.mxu0 0.0
    %550 = vmatpush1.xpose.msra.mxu0 0.0
    %551 = vmatprep.subr.mxu0 0.0
    %552 = vmatpush1.xpose.msra.mxu0 0.0
    %553 = vmatprep.subr.mxu0 0.0
    %554 = vmatpush1.xpose.msra.mxu0 0.0
    %555 = vmatprep.subr.mxu0 0.0
    %556 = vmatpush1.xpose.msra.mxu0 0.0
    %557 = vmatprep.subr.mxu0 0.0
    %558 = vmatpush1.xpose.msra.mxu0 0.0
    %559 = vmatprep.subr.mxu0 0.0
    %560 = vmatpush1.xpose.msra.mxu0 0.0
    %561 = vmatprep.subr.mxu0 0.0
    %562 = vmatpush1.xpose.msra.mxu0 0.0
    %563 = vmatprep.subr.mxu0 0.0
    %564 = vmatpush1.xpose.msra.mxu0 0.0
    %565 = vmatprep.subr.mxu0 0.0
    %566 = vmatpush1.xpose.msra.mxu0 0.0
    %567 = vmatprep.subr.mxu0 0.0
    %568 = vmatpush1.xpose.msra.mxu0 0.0
    %569 = vmatprep.subr.mxu0 0.0
    %570 = vmatpush1.xpose.msra.mxu0 0.0
    %571 = vmatprep.subr.mxu0 0.0
    %572 = vmatpush1.xpose.msra.mxu0 0.0
    %573 = vmatprep.subr.mxu0 0.0
    %574 = vmatpush1.xpose.msra.mxu0 0.0
    %575 = vmatprep.subr.mxu0 0.0
    %576 = vmatpush1.xpose.msra.mxu0 %v543
    %577 = vmatprep.subr.mxu0 0.0
    %578 = vmatpush2.xpose.msra.mxu0 0.0
    %579 = vmatprep.subr.mxu0 0.0
    %580 = vmatpush2.xpose.msra.mxu0 0.0
    %581 = vmatprep.subr.mxu0 0.0
    %582 = vmatpush2.xpose.msra.mxu0 0.0
    %583 = vmatprep.subr.mxu0 0.0
    %584 = vmatpush2.xpose.msra.mxu0 0.0
    %585 = vmatprep.subr.mxu0 0.0
    %586 = vmatpush2.xpose.msra.mxu0 0.0
    %587 = vmatprep.subr.mxu0 0.0
    %588 = vmatpush2.xpose.msra.mxu0 0.0
    %589 = vmatprep.subr.mxu0 0.0
    %590 = vmatpush2.xpose.msra.mxu0 0.0
    %591 = vmatprep.subr.mxu0 0.0
    %592 = vmatpush2.xpose.msra.mxu0 0.0
    %593 = vmatprep.subr.mxu0 0.0
    %594 = vmatpush2.xpose.msra.mxu0 0.0
    %595 = vmatprep.subr.mxu0 0.0
    %596 = vmatpush2.xpose.msra.mxu0 0.0
    %597 = vmatprep.subr.mxu0 0.0
    %598 = vmatpush2.xpose.msra.mxu0 0.0
    %599 = vmatprep.subr.mxu0 0.0
    %600 = vmatpush2.xpose.msra.mxu0 0.0
    %601 = vmatprep.subr.mxu0 0.0
    %602 = vmatpush2.xpose.msra.mxu0 0.0
    %603 = vmatprep.subr.mxu0 0.0
    %604 = vmatpush2.xpose.msra.mxu0 0.0
    %605 = vmatprep.subr.mxu0 0.0
    %606 = vmatpush2.xpose.msra.mxu0 0.0
    %607 = vmatprep.subr.mxu0 0.0
    %608 = vmatpush2.xpose.msra.mxu0 0.0
    %609 = vmatprep.mubr.f32.mxu0 0.0
    %610 = vmatmul.mubr.f32.gmra.mxu0 %v541
    %v611 = vpop.f32.mrf.mxu0
    %v612 = vadd.f32 0.0, %v611
    %v613 = vpop.f32.mrf.mxu0
    %614 = vdwg.mxu0
    %615 = vrot.lane.b32.xlu0 %v155, 96
    %v616 = vpop.permute.xlu0 %615
    %v617 = vsel %vm160, %v155, 0
    %v619 = vsel %vm160, %v616, 0
    %621 = vmatprep.subr.mxu0 0.0
    %622 = vmatpush1.xpose.msra.mxu0 0.0
    %623 = vmatprep.subr.mxu0 0.0
    %624 = vmatpush1.xpose.msra.mxu0 0.0
    %625 = vmatprep.subr.mxu0 0.0
    %626 = vmatpush1.xpose.msra.mxu0 0.0
    %627 = vmatprep.subr.mxu0 0.0
    %628 = vmatpush1.xpose.msra.mxu0 0.0
    %629 = vmatprep.subr.mxu0 0.0
    %630 = vmatpush1.xpose.msra.mxu0 0.0
    %631 = vmatprep.subr.mxu0 0.0
    %632 = vmatpush1.xpose.msra.mxu0 0.0
    %633 = vmatprep.subr.mxu0 0.0
    %634 = vmatpush1.xpose.msra.mxu0 0.0
    %635 = vmatprep.subr.mxu0 0.0
    %636 = vmatpush1.xpose.msra.mxu0 0.0
    %637 = vmatprep.subr.mxu0 0.0
    %638 = vmatpush1.xpose.msra.mxu0 0.0
    %639 = vmatprep.subr.mxu0 0.0
    %640 = vmatpush1.xpose.msra.mxu0 0.0
    %641 = vmatprep.subr.mxu0 0.0
    %642 = vmatpush1.xpose.msra.mxu0 0.0
    %643 = vmatprep.subr.mxu0 0.0
    %644 = vmatpush1.xpose.msra.mxu0 0.0
    %645 = vmatprep.subr.mxu0 0.0
    %646 = vmatpush1.xpose.msra.mxu0 0.0
    %647 = vmatprep.subr.mxu0 0.0
    %648 = vmatpush1.xpose.msra.mxu0 0.0
    %649 = vmatprep.subr.mxu0 0.0
    %650 = vmatpush1.xpose.msra.mxu0 0.0
    %651 = vmatprep.subr.mxu0 0.0
    %652 = vmatpush1.xpose.msra.mxu0 %v619
    %653 = vmatprep.subr.mxu0 0.0
    %654 = vmatpush2.xpose.msra.mxu0 0.0
    %655 = vmatprep.subr.mxu0 0.0
    %656 = vmatpush2.xpose.msra.mxu0 0.0
    %657 = vmatprep.subr.mxu0 0.0
    %658 = vmatpush2.xpose.msra.mxu0 0.0
    %659 = vmatprep.subr.mxu0 0.0
    %660 = vmatpush2.xpose.msra.mxu0 0.0
    %661 = vmatprep.subr.mxu0 0.0
    %662 = vmatpush2.xpose.msra.mxu0 0.0
    %663 = vmatprep.subr.mxu0 0.0
    %664 = vmatpush2.xpose.msra.mxu0 0.0
    %665 = vmatprep.subr.mxu0 0.0
    %666 = vmatpush2.xpose.msra.mxu0 0.0
    %667 = vmatprep.subr.mxu0 0.0
    %668 = vmatpush2.xpose.msra.mxu0 0.0
    %669 = vmatprep.subr.mxu0 0.0
    %670 = vmatpush2.xpose.msra.mxu0 0.0
    %671 = vmatprep.subr.mxu0 0.0
    %672 = vmatpush2.xpose.msra.mxu0 0.0
    %673 = vmatprep.subr.mxu0 0.0
    %674 = vmatpush2.xpose.msra.mxu0 0.0
    %675 = vmatprep.subr.mxu0 0.0
    %676 = vmatpush2.xpose.msra.mxu0 0.0
    %677 = vmatprep.subr.mxu0 0.0
    %678 = vmatpush2.xpose.msra.mxu0 0.0
    %679 = vmatprep.subr.mxu0 0.0
    %680 = vmatpush2.xpose.msra.mxu0 0.0
    %681 = vmatprep.subr.mxu0 0.0
    %682 = vmatpush2.xpose.msra.mxu0 0.0
    %683 = vmatprep.subr.mxu0 0.0
    %684 = vmatpush2.xpose.msra.mxu0 0.0
    %685 = vmatprep.mubr.f32.mxu0 0.0
    %686 = vmatmul.mubr.f32.gmra.mxu0 %v617
    %v687 = vpop.f32.mrf.mxu0
    %v688 = vadd.f32 0.0, %v687
    %v689 = vpop.f32.mrf.mxu0
    %690 = vdwg.mxu0
    %691 = vrot.lane.b32.xlu0 %v157, 96
    %v692 = vpop.permute.xlu0 %691
    %v693 = vsel %vm160, %v157, 0
    %v695 = vsel %vm160, %v692, 0
    %697 = vmatprep.subr.mxu0 0.0
    %698 = vmatpush1.xpose.msra.mxu0 0.0
    %699 = vmatprep.subr.mxu0 0.0
    %700 = vmatpush1.xpose.msra.mxu0 0.0
    %701 = vmatprep.subr.mxu0 0.0
    %702 = vmatpush1.xpose.msra.mxu0 0.0
    %703 = vmatprep.subr.mxu0 0.0
    %704 = vmatpush1.xpose.msra.mxu0 0.0
    %705 = vmatprep.subr.mxu0 0.0
    %706 = vmatpush1.xpose.msra.mxu0 0.0
    %707 = vmatprep.subr.mxu0 0.0
    %708 = vmatpush1.xpose.msra.mxu0 0.0
    %709 = vmatprep.subr.mxu0 0.0
    %710 = vmatpush1.xpose.msra.mxu0 0.0
    %711 = vmatprep.subr.mxu0 0.0
    %712 = vmatpush1.xpose.msra.mxu0 0.0
    %713 = vmatprep.subr.mxu0 0.0
    %714 = vmatpush1.xpose.msra.mxu0 0.0
    %715 = vmatprep.subr.mxu0 0.0
    %716 = vmatpush1.xpose.msra.mxu0 0.0
    %717 = vmatprep.subr.mxu0 0.0
    %718 = vmatpush1.xpose.msra.mxu0 0.0
    %719 = vmatprep.subr.mxu0 0.0
    %720 = vmatpush1.xpose.msra.mxu0 0.0
    %721 = vmatprep.subr.mxu0 0.0
    %722 = vmatpush1.xpose.msra.mxu0 0.0
    %723 = vmatprep.subr.mxu0 0.0
    %724 = vmatpush1.xpose.msra.mxu0 0.0
    %725 = vmatprep.subr.mxu0 0.0
    %726 = vmatpush1.xpose.msra.mxu0 0.0
    %727 = vmatprep.subr.mxu0 0.0
    %728 = vmatpush1.xpose.msra.mxu0 %v695
    %729 = vmatprep.subr.mxu0 0.0
    %730 = vmatpush2.xpose.msra.mxu0 0.0
    %731 = vmatprep.subr.mxu0 0.0
    %732 = vmatpush2.xpose.msra.mxu0 0.0
    %733 = vmatprep.subr.mxu0 0.0
    %734 = vmatpush2.xpose.msra.mxu0 0.0
    %735 = vmatprep.subr.mxu0 0.0
    %736 = vmatpush2.xpose.msra.mxu0 0.0
    %737 = vmatprep.subr.mxu0 0.0
    %738 = vmatpush2.xpose.msra.mxu0 0.0
    %739 = vmatprep.subr.mxu0 0.0
    %740 = vmatpush2.xpose.msra.mxu0 0.0
    %741 = vmatprep.subr.mxu0 0.0
    %742 = vmatpush2.xpose.msra.mxu0 0.0
    %743 = vmatprep.subr.mxu0 0.0
    %744 = vmatpush2.xpose.msra.mxu0 0.0
    %745 = vmatprep.subr.mxu0 0.0
    %746 = vmatpush2.xpose.msra.mxu0 0.0
    %747 = vmatprep.subr.mxu0 0.0
    %748 = vmatpush2.xpose.msra.mxu0 0.0
    %749 = vmatprep.subr.mxu0 0.0
    %750 = vmatpush2.xpose.msra.mxu0 0.0
    %751 = vmatprep.subr.mxu0 0.0
    %752 = vmatpush2.xpose.msra.mxu0 0.0
    %753 = vmatprep.subr.mxu0 0.0
    %754 = vmatpush2.xpose.msra.mxu0 0.0
    %755 = vmatprep.subr.mxu0 0.0
    %756 = vmatpush2.xpose.msra.mxu0 0.0
    %757 = vmatprep.subr.mxu0 0.0
    %758 = vmatpush2.xpose.msra.mxu0 0.0
    %759 = vmatprep.subr.mxu0 0.0
    %760 = vmatpush2.xpose.msra.mxu0 0.0
    %761 = vmatprep.mubr.f32.mxu0 0.0
    %762 = vmatmul.mubr.f32.gmra.mxu0 %v693
    %v763 = vpop.f32.mrf.mxu0
    %v764 = vadd.f32 0.0, %v763
    %v765 = vpop.f32.mrf.mxu0
    %766 = vdwg.mxu0
    %v767 = vmul.f32 %v232, 0.35355338
    %v768 = vmul.f32 %v308, 0.35355338
    %v769 = vmul.f32 %v384, 0.35355338
    %v770 = vmul.f32 %v460, 0.35355338
    %v771 = vmul.f32 %v536, 0.35355338
    %v772 = vmul.f32 %v612, 0.35355338
    %v773 = vmul.f32 %v688, 0.35355338
    %v774 = vmul.f32 %v764, 0.35355338
    %v775 = vsel %vm160, %v767, -inf
    %776 = vmax.xlane.f32.xlu0 %v775
    %v777 = vpop.xlane.xlu0 %776
    %v778 = vsel %vm160, %v768, -inf
    %779 = vmax.xlane.f32.xlu0 %v778
    %v780 = vpop.xlane.xlu0 %779
    %v781 = vsel %vm160, %v769, -inf
    %782 = vmax.xlane.f32.xlu0 %v781
    %v783 = vpop.xlane.xlu0 %782
    %v784 = vsel %vm160, %v770, -inf
    %785 = vmax.xlane.f32.xlu0 %v784
    %v786 = vpop.xlane.xlu0 %785
    %v787 = vsel %vm160, %v771, -inf
    %788 = vmax.xlane.f32.xlu0 %v787
    %v789 = vpop.xlane.xlu0 %788
    %v790 = vsel %vm160, %v772, -inf
    %791 = vmax.xlane.f32.xlu0 %v790
    %v792 = vpop.xlane.xlu0 %791
    %v793 = vsel %vm160, %v773, -inf
    %794 = vmax.xlane.f32.xlu0 %v793
    %v795 = vpop.xlane.xlu0 %794
    %v796 = vsel %vm160, %v774, -inf
    %797 = vmax.xlane.f32.xlu0 %v796
    %v798 = vpop.xlane.xlu0 %797
    %v799 = vsub.f32 %v767, %v777
    %v800 = vsub.f32 %v768, %v780
    %v801 = vsub.f32 %v769, %v783
    %v802 = vsub.f32 %v770, %v786
    %v803 = vsub.f32 %v771, %v789
    %v804 = vsub.f32 %v772, %v792
    %v805 = vsub.f32 %v773, %v795
    %v806 = vsub.f32 %v774, %v798
    %v807 = vmul.f32 %v799, 1.442695
    %v808 = vpow.pop %v807
    %v809 = vmul.f32 %v800, 1.442695
    %v810 = vpow.pop %v809
    %v811 = vmul.f32 %v801, 1.442695
    %v812 = vpow.pop %v811
    %v813 = vmul.f32 %v802, 1.442695
    %v814 = vpow.pop %v813
    %v815 = vmul.f32 %v803, 1.442695
    %v816 = vpow.pop %v815
    %v817 = vmul.f32 %v804, 1.442695
    %v818 = vpow.pop %v817
    %v819 = vmul.f32 %v805, 1.442695
    %v820 = vpow.pop %v819
    %v821 = vmul.f32 %v806, 1.442695
    %v822 = vpow.pop %v821
    %v823 = vsel %vm160, %v808, 0.0
    %824 = vadd.xlane.f32.xlu0 %v823
    %v825 = vpop.xlane.xlu0 %824
    %v826 = vsel %vm160, %v810, 0.0
    %827 = vadd.xlane.f32.xlu0 %v826
    %v828 = vpop.xlane.xlu0 %827
    %v829 = vsel %vm160, %v812, 0.0
    %830 = vadd.xlane.f32.xlu0 %v829
    %v831 = vpop.xlane.xlu0 %830
    %v832 = vsel %vm160, %v814, 0.0
    %833 = vadd.xlane.f32.xlu0 %v832
    %v834 = vpop.xlane.xlu0 %833
    %v835 = vsel %vm160, %v816, 0.0
    %836 = vadd.xlane.f32.xlu0 %v835
    %v837 = vpop.xlane.xlu0 %836
    %v838 = vsel %vm160, %v818, 0.0
    %839 = vadd.xlane.f32.xlu0 %v838
    %v840 = vpop.xlane.xlu0 %839
    %v841 = vsel %vm160, %v820, 0.0
    %842 = vadd.xlane.f32.xlu0 %v841
    %v843 = vpop.xlane.xlu0 %842
    %v844 = vsel %vm160, %v822, 0.0
    %845 = vadd.xlane.f32.xlu0 %v844
    %v846 = vpop.xlane.xlu0 %845
    %v847 = vrcp.pop %v825
    %v848 = vrcp.pop %v828
    %v849 = vrcp.pop %v831
    %v850 = vrcp.pop %v834
    %v851 = vrcp.pop %v837
    %v852 = vrcp.pop %v840
    %v853 = vrcp.pop %v843
    %v854 = vrcp.pop %v846
    %v855 = vmul.f32 %v808, %v847
    %v856 = vmul.f32 %v810, %v848
    %v857 = vmul.f32 %v812, %v849
    %v858 = vmul.f32 %v814, %v850
    %v859 = vmul.f32 %v816, %v851
    %v860 = vmul.f32 %v818, %v852
    %v861 = vmul.f32 %v820, %v853
    %v862 = vmul.f32 %v822, %v854
    %863 = vrot.lane.b32.xlu0 %v136, 64
    %v864 = vpop.permute.xlu0 %863
    %v867 = vsel %vm160, %v855, 0
    %869 = vmatprep.subr.mxu0 0.0
    %870 = vmatpush1.msra.mxu0 0.0
    %871 = vmatprep.subr.mxu0 0.0
    %872 = vmatpush1.msra.mxu0 0.0
    %873 = vmatprep.subr.mxu0 0.0
    %874 = vmatpush1.msra.mxu0 0.0
    %875 = vmatprep.subr.mxu0 0.0
    %876 = vmatpush1.msra.mxu0 0.0
    %877 = vmatprep.subr.mxu0 0.0
    %878 = vmatpush1.msra.mxu0 0.0
    %879 = vmatprep.subr.mxu0 0.0
    %880 = vmatpush1.msra.mxu0 0.0
    %881 = vmatprep.subr.mxu0 0.0
    %882 = vmatpush1.msra.mxu0 0.0
    %883 = vmatprep.subr.mxu0 0.0
    %884 = vmatpush1.msra.mxu0 0.0
    %885 = vmatprep.subr.mxu0 0.0
    %886 = vmatpush1.msra.mxu0 0.0
    %887 = vmatprep.subr.mxu0 0.0
    %888 = vmatpush1.msra.mxu0 0.0
    %889 = vmatprep.subr.mxu0 0.0
    %890 = vmatpush1.msra.mxu0 0.0
    %891 = vmatprep.subr.mxu0 0.0
    %892 = vmatpush1.msra.mxu0 0.0
    %893 = vmatprep.subr.mxu0 0.0
    %894 = vmatpush1.msra.mxu0 0.0
    %895 = vmatprep.subr.mxu0 0.0
    %896 = vmatpush1.msra.mxu0 0.0
    %897 = vmatprep.subr.mxu0 0.0
    %898 = vmatpush1.msra.mxu0 0.0
    %899 = vmatprep.subr.mxu0 0.0
    %900 = vmatpush1.msra.mxu0 %v864
    %901 = vmatprep.subr.mxu0 0.0
    %902 = vmatpush2.msra.mxu0 0.0
    %903 = vmatprep.subr.mxu0 0.0
    %904 = vmatpush2.msra.mxu0 0.0
    %905 = vmatprep.subr.mxu0 0.0
    %906 = vmatpush2.msra.mxu0 0.0
    %907 = vmatprep.subr.mxu0 0.0
    %908 = vmatpush2.msra.mxu0 0.0
    %909 = vmatprep.subr.mxu0 0.0
    %910 = vmatpush2.msra.mxu0 0.0
    %911 = vmatprep.subr.mxu0 0.0
    %912 = vmatpush2.msra.mxu0 0.0
    %913 = vmatprep.subr.mxu0 0.0
    %914 = vmatpush2.msra.mxu0 0.0
    %915 = vmatprep.subr.mxu0 0.0
    %916 = vmatpush2.msra.mxu0 0.0
    %917 = vmatprep.subr.mxu0 0.0
    %918 = vmatpush2.msra.mxu0 0.0
    %919 = vmatprep.subr.mxu0 0.0
    %920 = vmatpush2.msra.mxu0 0.0
    %921 = vmatprep.subr.mxu0 0.0
    %922 = vmatpush2.msra.mxu0 0.0
    %923 = vmatprep.subr.mxu0 0.0
    %924 = vmatpush2.msra.mxu0 0.0
    %925 = vmatprep.subr.mxu0 0.0
    %926 = vmatpush2.msra.mxu0 0.0
    %927 = vmatprep.subr.mxu0 0.0
    %928 = vmatpush2.msra.mxu0 0.0
    %929 = vmatprep.subr.mxu0 0.0
    %930 = vmatpush2.msra.mxu0 0.0
    %931 = vmatprep.subr.mxu0 0.0
    %932 = vmatpush2.msra.mxu0 0.0
    %933 = vmatprep.mubr.f32.mxu0 0.0
    %934 = vmatmul.mubr.f32.gmra.mxu0 %v867
    %v935 = vpop.f32.mrf.mxu0
    %v936 = vadd.f32 0.0, %v935
    %v937 = vpop.f32.mrf.mxu0
    %938 = vdwg.mxu0
    %939 = vrot.lane.b32.xlu0 %v141, 64
    %v940 = vpop.permute.xlu0 %939
    %v943 = vsel %vm160, %v856, 0
    %945 = vmatprep.subr.mxu0 0.0
    %946 = vmatpush1.msra.mxu0 0.0
    %947 = vmatprep.subr.mxu0 0.0
    %948 = vmatpush1.msra.mxu0 0.0
    %949 = vmatprep.subr.mxu0 0.0
    %950 = vmatpush1.msra.mxu0 0.0
    %951 = vmatprep.subr.mxu0 0.0
    %952 = vmatpush1.msra.mxu0 0.0
    %953 = vmatprep.subr.mxu0 0.0
    %954 = vmatpush1.msra.mxu0 0.0
    %955 = vmatprep.subr.mxu0 0.0
    %956 = vmatpush1.msra.mxu0 0.0
    %957 = vmatprep.subr.mxu0 0.0
    %958 = vmatpush1.msra.mxu0 0.0
    %959 = vmatprep.subr.mxu0 0.0
    %960 = vmatpush1.msra.mxu0 0.0
    %961 = vmatprep.subr.mxu0 0.0
    %962 = vmatpush1.msra.mxu0 0.0
    %963 = vmatprep.subr.mxu0 0.0
    %964 = vmatpush1.msra.mxu0 0.0
    %965 = vmatprep.subr.mxu0 0.0
    %966 = vmatpush1.msra.mxu0 0.0
    %967 = vmatprep.subr.mxu0 0.0
    %968 = vmatpush1.msra.mxu0 0.0
    %969 = vmatprep.subr.mxu0 0.0
    %970 = vmatpush1.msra.mxu0 0.0
    %971 = vmatprep.subr.mxu0 0.0
    %972 = vmatpush1.msra.mxu0 0.0
    %973 = vmatprep.subr.mxu0 0.0
    %974 = vmatpush1.msra.mxu0 0.0
    %975 = vmatprep.subr.mxu0 0.0
    %976 = vmatpush1.msra.mxu0 %v940
    %977 = vmatprep.subr.mxu0 0.0
    %978 = vmatpush2.msra.mxu0 0.0
    %979 = vmatprep.subr.mxu0 0.0
    %980 = vmatpush2.msra.mxu0 0.0
    %981 = vmatprep.subr.mxu0 0.0
    %982 = vmatpush2.msra.mxu0 0.0
    %983 = vmatprep.subr.mxu0 0.0
    %984 = vmatpush2.msra.mxu0 0.0
    %985 = vmatprep.subr.mxu0 0.0
    %986 = vmatpush2.msra.mxu0 0.0
    %987 = vmatprep.subr.mxu0 0.0
    %988 = vmatpush2.msra.mxu0 0.0
    %989 = vmatprep.subr.mxu0 0.0
    %990 = vmatpush2.msra.mxu0 0.0
    %991 = vmatprep.subr.mxu0 0.0
    %992 = vmatpush2.msra.mxu0 0.0
    %993 = vmatprep.subr.mxu0 0.0
    %994 = vmatpush2.msra.mxu0 0.0
    %995 = vmatprep.subr.mxu0 0.0
    %996 = vmatpush2.msra.mxu0 0.0
    %997 = vmatprep.subr.mxu0 0.0
    %998 = vmatpush2.msra.mxu0 0.0
    %999 = vmatprep.subr.mxu0 0.0
    %1000 = vmatpush2.msra.mxu0 0.0
    %1001 = vmatprep.subr.mxu0 0.0
    %1002 = vmatpush2.msra.mxu0 0.0
    %1003 = vmatprep.subr.mxu0 0.0
    %1004 = vmatpush2.msra.mxu0 0.0
    %1005 = vmatprep.subr.mxu0 0.0
    %1006 = vmatpush2.msra.mxu0 0.0
    %1007 = vmatprep.subr.mxu0 0.0
    %1008 = vmatpush2.msra.mxu0 0.0
    %1009 = vmatprep.mubr.f32.mxu0 0.0
    %1010 = vmatmul.mubr.f32.gmra.mxu0 %v943
    %v1011 = vpop.f32.mrf.mxu0
    %v1012 = vadd.f32 0.0, %v1011
    %v1013 = vpop.f32.mrf.mxu0
    %1014 = vdwg.mxu0
    %1015 = vrot.lane.b32.xlu0 %v147, 64
    %v1016 = vpop.permute.xlu0 %1015
    %v1019 = vsel %vm160, %v857, 0
    %1021 = vmatprep.subr.mxu0 0.0
    %1022 = vmatpush1.msra.mxu0 0.0
    %1023 = vmatprep.subr.mxu0 0.0
    %1024 = vmatpush1.msra.mxu0 0.0
    %1025 = vmatprep.subr.mxu0 0.0
    %1026 = vmatpush1.msra.mxu0 0.0
    %1027 = vmatprep.subr.mxu0 0.0
    %1028 = vmatpush1.msra.mxu0 0.0
    %1029 = vmatprep.subr.mxu0 0.0
    %1030 = vmatpush1.msra.mxu0 0.0
    %1031 = vmatprep.subr.mxu0 0.0
    %1032 = vmatpush1.msra.mxu0 0.0
    %1033 = vmatprep.subr.mxu0 0.0
    %1034 = vmatpush1.msra.mxu0 0.0
    %1035 = vmatprep.subr.mxu0 0.0
    %1036 = vmatpush1.msra.mxu0 0.0
    %1037 = vmatprep.subr.mxu0 0.0
    %1038 = vmatpush1.msra.mxu0 0.0
    %1039 = vmatprep.subr.mxu0 0.0
    %1040 = vmatpush1.msra.mxu0 0.0
    %1041 = vmatprep.subr.mxu0 0.0
    %1042 = vmatpush1.msra.mxu0 0.0
    %1043 = vmatprep.subr.mxu0 0.0
    %1044 = vmatpush1.msra.mxu0 0.0
    %1045 = vmatprep.subr.mxu0 0.0
    %1046 = vmatpush1.msra.mxu0 0.0
    %1047 = vmatprep.subr.mxu0 0.0
    %1048 = vmatpush1.msra.mxu0 0.0
    %1049 = vmatprep.subr.mxu0 0.0
    %1050 = vmatpush1.msra.mxu0 0.0
    %1051 = vmatprep.subr.mxu0 0.0
    %1052 = vmatpush1.msra.mxu0 %v1016
    %1053 = vmatprep.subr.mxu0 0.0
    %1054 = vmatpush2.msra.mxu0 0.0
    %1055 = vmatprep.subr.mxu0 0.0
    %1056 = vmatpush2.msra.mxu0 0.0
    %1057 = vmatprep.subr.mxu0 0.0
    %1058 = vmatpush2.msra.mxu0 0.0
    %1059 = vmatprep.subr.mxu0 0.0
    %1060 = vmatpush2.msra.mxu0 0.0
    %1061 = vmatprep.subr.mxu0 0.0
    %1062 = vmatpush2.msra.mxu0 0.0
    %1063 = vmatprep.subr.mxu0 0.0
    %1064 = vmatpush2.msra.mxu0 0.0
    %1065 = vmatprep.subr.mxu0 0.0
    %1066 = vmatpush2.msra.mxu0 0.0
    %1067 = vmatprep.subr.mxu0 0.0
    %1068 = vmatpush2.msra.mxu0 0.0
    %1069 = vmatprep.subr.mxu0 0.0
    %1070 = vmatpush2.msra.mxu0 0.0
    %1071 = vmatprep.subr.mxu0 0.0
    %1072 = vmatpush2.msra.mxu0 0.0
    %1073 = vmatprep.subr.mxu0 0.0
    %1074 = vmatpush2.msra.mxu0 0.0
    %1075 = vmatprep.subr.mxu0 0.0
    %1076 = vmatpush2.msra.mxu0 0.0
    %1077 = vmatprep.subr.mxu0 0.0
    %1078 = vmatpush2.msra.mxu0 0.0
    %1079 = vmatprep.subr.mxu0 0.0
    %1080 = vmatpush2.msra.mxu0 0.0
    %1081 = vmatprep.subr.mxu0 0.0
    %1082 = vmatpush2.msra.mxu0 0.0
    %1083 = vmatprep.subr.mxu0 0.0
    %1084 = vmatpush2.msra.mxu0 0.0
    %1085 = vmatprep.mubr.f32.mxu0 0.0
    %1086 = vmatmul.mubr.f32.gmra.mxu0 %v1019
    %v1087 = vpop.f32.mrf.mxu0
    %v1088 = vadd.f32 0.0, %v1087
    %v1089 = vpop.f32.mrf.mxu0
    %1090 = vdwg.mxu0
    %1091 = vrot.lane.b32.xlu0 %v149, 64
    %v1092 = vpop.permute.xlu0 %1091
    %v1095 = vsel %vm160, %v858, 0
    %1097 = vmatprep.subr.mxu0 0.0
    %1098 = vmatpush1.msra.mxu0 0.0
    %1099 = vmatprep.subr.mxu0 0.0
    %1100 = vmatpush1.msra.mxu0 0.0
    %1101 = vmatprep.subr.mxu0 0.0
    %1102 = vmatpush1.msra.mxu0 0.0
    %1103 = vmatprep.subr.mxu0 0.0
    %1104 = vmatpush1.msra.mxu0 0.0
    %1105 = vmatprep.subr.mxu0 0.0
    %1106 = vmatpush1.msra.mxu0 0.0
    %1107 = vmatprep.subr.mxu0 0.0
    %1108 = vmatpush1.msra.mxu0 0.0
    %1109 = vmatprep.subr.mxu0 0.0
    %1110 = vmatpush1.msra.mxu0 0.0
    %1111 = vmatprep.subr.mxu0 0.0
    %1112 = vmatpush1.msra.mxu0 0.0
    %1113 = vmatprep.subr.mxu0 0.0
    %1114 = vmatpush1.msra.mxu0 0.0
    %1115 = vmatprep.subr.mxu0 0.0
    %1116 = vmatpush1.msra.mxu0 0.0
    %1117 = vmatprep.subr.mxu0 0.0
    %1118 = vmatpush1.msra.mxu0 0.0
    %1119 = vmatprep.subr.mxu0 0.0
    %1120 = vmatpush1.msra.mxu0 0.0
    %1121 = vmatprep.subr.mxu0 0.0
    %1122 = vmatpush1.msra.mxu0 0.0
    %1123 = vmatprep.subr.mxu0 0.0
    %1124 = vmatpush1.msra.mxu0 0.0
    %1125 = vmatprep.subr.mxu0 0.0
    %1126 = vmatpush1.msra.mxu0 0.0
    %1127 = vmatprep.subr.mxu0 0.0
    %1128 = vmatpush1.msra.mxu0 %v1092
    %1129 = vmatprep.subr.mxu0 0.0
    %1130 = vmatpush2.msra.mxu0 0.0
    %1131 = vmatprep.subr.mxu0 0.0
    %1132 = vmatpush2.msra.mxu0 0.0
    %1133 = vmatprep.subr.mxu0 0.0
    %1134 = vmatpush2.msra.mxu0 0.0
    %1135 = vmatprep.subr.mxu0 0.0
    %1136 = vmatpush2.msra.mxu0 0.0
    %1137 = vmatprep.subr.mxu0 0.0
    %1138 = vmatpush2.msra.mxu0 0.0
    %1139 = vmatprep.subr.mxu0 0.0
    %1140 = vmatpush2.msra.mxu0 0.0
    %1141 = vmatprep.subr.mxu0 0.0
    %1142 = vmatpush2.msra.mxu0 0.0
    %1143 = vmatprep.subr.mxu0 0.0
    %1144 = vmatpush2.msra.mxu0 0.0
    %1145 = vmatprep.subr.mxu0 0.0
    %1146 = vmatpush2.msra.mxu0 0.0
    %1147 = vmatprep.subr.mxu0 0.0
    %1148 = vmatpush2.msra.mxu0 0.0
    %1149 = vmatprep.subr.mxu0 0.0
    %1150 = vmatpush2.msra.mxu0 0.0
    %1151 = vmatprep.subr.mxu0 0.0
    %1152 = vmatpush2.msra.mxu0 0.0
    %1153 = vmatprep.subr.mxu0 0.0
    %1154 = vmatpush2.msra.mxu0 0.0
    %1155 = vmatprep.subr.mxu0 0.0
    %1156 = vmatpush2.msra.mxu0 0.0
    %1157 = vmatprep.subr.mxu0 0.0
    %1158 = vmatpush2.msra.mxu0 0.0
    %1159 = vmatprep.subr.mxu0 0.0
    %1160 = vmatpush2.msra.mxu0 0.0
    %1161 = vmatprep.mubr.f32.mxu0 0.0
    %1162 = vmatmul.mubr.f32.gmra.mxu0 %v1095
    %v1163 = vpop.f32.mrf.mxu0
    %v1164 = vadd.f32 0.0, %v1163
    %v1165 = vpop.f32.mrf.mxu0
    %1166 = vdwg.mxu0
    %1167 = vrot.lane.b32.xlu0 %v151, 64
    %v1168 = vpop.permute.xlu0 %1167
    %v1171 = vsel %vm160, %v859, 0
    %1173 = vmatprep.subr.mxu0 0.0
    %1174 = vmatpush1.msra.mxu0 0.0
    %1175 = vmatprep.subr.mxu0 0.0
    %1176 = vmatpush1.msra.mxu0 0.0
    %1177 = vmatprep.subr.mxu0 0.0
    %1178 = vmatpush1.msra.mxu0 0.0
    %1179 = vmatprep.subr.mxu0 0.0
    %1180 = vmatpush1.msra.mxu0 0.0
    %1181 = vmatprep.subr.mxu0 0.0
    %1182 = vmatpush1.msra.mxu0 0.0
    %1183 = vmatprep.subr.mxu0 0.0
    %1184 = vmatpush1.msra.mxu0 0.0
    %1185 = vmatprep.subr.mxu0 0.0
    %1186 = vmatpush1.msra.mxu0 0.0
    %1187 = vmatprep.subr.mxu0 0.0
    %1188 = vmatpush1.msra.mxu0 0.0
    %1189 = vmatprep.subr.mxu0 0.0
    %1190 = vmatpush1.msra.mxu0 0.0
    %1191 = vmatprep.subr.mxu0 0.0
    %1192 = vmatpush1.msra.mxu0 0.0
    %1193 = vmatprep.subr.mxu0 0.0
    %1194 = vmatpush1.msra.mxu0 0.0
    %1195 = vmatprep.subr.mxu0 0.0
    %1196 = vmatpush1.msra.mxu0 0.0
    %1197 = vmatprep.subr.mxu0 0.0
    %1198 = vmatpush1.msra.mxu0 0.0
    %1199 = vmatprep.subr.mxu0 0.0
    %1200 = vmatpush1.msra.mxu0 0.0
    %1201 = vmatprep.subr.mxu0 0.0
    %1202 = vmatpush1.msra.mxu0 0.0
    %1203 = vmatprep.subr.mxu0 0.0
    %1204 = vmatpush1.msra.mxu0 %v1168
    %1205 = vmatprep.subr.mxu0 0.0
    %1206 = vmatpush2.msra.mxu0 0.0
    %1207 = vmatprep.subr.mxu0 0.0
    %1208 = vmatpush2.msra.mxu0 0.0
    %1209 = vmatprep.subr.mxu0 0.0
    %1210 = vmatpush2.msra.mxu0 0.0
    %1211 = vmatprep.subr.mxu0 0.0
    %1212 = vmatpush2.msra.mxu0 0.0
    %1213 = vmatprep.subr.mxu0 0.0
    %1214 = vmatpush2.msra.mxu0 0.0
    %1215 = vmatprep.subr.mxu0 0.0
    %1216 = vmatpush2.msra.mxu0 0.0
    %1217 = vmatprep.subr.mxu0 0.0
    %1218 = vmatpush2.msra.mxu0 0.0
    %1219 = vmatprep.subr.mxu0 0.0
    %1220 = vmatpush2.msra.mxu0 0.0
    %1221 = vmatprep.subr.mxu0 0.0
    %1222 = vmatpush2.msra.mxu0 0.0
    %1223 = vmatprep.subr.mxu0 0.0
    %1224 = vmatpush2.msra.mxu0 0.0
    %1225 = vmatprep.subr.mxu0 0.0
    %1226 = vmatpush2.msra.mxu0 0.0
    %1227 = vmatprep.subr.mxu0 0.0
    %1228 = vmatpush2.msra.mxu0 0.0
    %1229 = vmatprep.subr.mxu0 0.0
    %1230 = vmatpush2.msra.mxu0 0.0
    %1231 = vmatprep.subr.mxu0 0.0
    %1232 = vmatpush2.msra.mxu0 0.0
    %1233 = vmatprep.subr.mxu0 0.0
    %1234 = vmatpush2.msra.mxu0 0.0
    %1235 = vmatprep.subr.mxu0 0.0
    %1236 = vmatpush2.msra.mxu0 0.0
    %1237 = vmatprep.mubr.f32.mxu0 0.0
    %1238 = vmatmul.mubr.f32.gmra.mxu0 %v1171
    %v1239 = vpop.f32.mrf.mxu0
    %v1240 = vadd.f32 0.0, %v1239
    %v1241 = vpop.f32.mrf.mxu0
    %1242 = vdwg.mxu0
    %1243 = vrot.lane.b32.xlu0 %v153, 64
    %v1244 = vpop.permute.xlu0 %1243
    %v1247 = vsel %vm160, %v860, 0
    %1249 = vmatprep.subr.mxu0 0.0
    %1250 = vmatpush1.msra.mxu0 0.0
    %1251 = vmatprep.subr.mxu0 0.0
    %1252 = vmatpush1.msra.mxu0 0.0
    %1253 = vmatprep.subr.mxu0 0.0
    %1254 = vmatpush1.msra.mxu0 0.0
    %1255 = vmatprep.subr.mxu0 0.0
    %1256 = vmatpush1.msra.mxu0 0.0
    %1257 = vmatprep.subr.mxu0 0.0
    %1258 = vmatpush1.msra.mxu0 0.0
    %1259 = vmatprep.subr.mxu0 0.0
    %1260 = vmatpush1.msra.mxu0 0.0
    %1261 = vmatprep.subr.mxu0 0.0
    %1262 = vmatpush1.msra.mxu0 0.0
    %1263 = vmatprep.subr.mxu0 0.0
    %1264 = vmatpush1.msra.mxu0 0.0
    %1265 = vmatprep.subr.mxu0 0.0
    %1266 = vmatpush1.msra.mxu0 0.0
    %1267 = vmatprep.subr.mxu0 0.0
    %1268 = vmatpush1.msra.mxu0 0.0
    %1269 = vmatprep.subr.mxu0 0.0
    %1270 = vmatpush1.msra.mxu0 0.0
    %1271 = vmatprep.subr.mxu0 0.0
    %1272 = vmatpush1.msra.mxu0 0.0
    %1273 = vmatprep.subr.mxu0 0.0
    %1274 = vmatpush1.msra.mxu0 0.0
    %1275 = vmatprep.subr.mxu0 0.0
    %1276 = vmatpush1.msra.mxu0 0.0
    %1277 = vmatprep.subr.mxu0 0.0
    %1278 = vmatpush1.msra.mxu0 0.0
    %1279 = vmatprep.subr.mxu0 0.0
    %1280 = vmatpush1.msra.mxu0 %v1244
    %1281 = vmatprep.subr.mxu0 0.0
    %1282 = vmatpush2.msra.mxu0 0.0
    %1283 = vmatprep.subr.mxu0 0.0
    %1284 = vmatpush2.msra.mxu0 0.0
    %1285 = vmatprep.subr.mxu0 0.0
    %1286 = vmatpush2.msra.mxu0 0.0
    %1287 = vmatprep.subr.mxu0 0.0
    %1288 = vmatpush2.msra.mxu0 0.0
    %1289 = vmatprep.subr.mxu0 0.0
    %1290 = vmatpush2.msra.mxu0 0.0
    %1291 = vmatprep.subr.mxu0 0.0
    %1292 = vmatpush2.msra.mxu0 0.0
    %1293 = vmatprep.subr.mxu0 0.0
    %1294 = vmatpush2.msra.mxu0 0.0
    %1295 = vmatprep.subr.mxu0 0.0
    %1296 = vmatpush2.msra.mxu0 0.0
    %1297 = vmatprep.subr.mxu0 0.0
    %1298 = vmatpush2.msra.mxu0 0.0
    %1299 = vmatprep.subr.mxu0 0.0
    %1300 = vmatpush2.msra.mxu0 0.0
    %1301 = vmatprep.subr.mxu0 0.0
    %1302 = vmatpush2.msra.mxu0 0.0
    %1303 = vmatprep.subr.mxu0 0.0
    %1304 = vmatpush2.msra.mxu0 0.0
    %1305 = vmatprep.subr.mxu0 0.0
    %1306 = vmatpush2.msra.mxu0 0.0
    %1307 = vmatprep.subr.mxu0 0.0
    %1308 = vmatpush2.msra.mxu0 0.0
    %1309 = vmatprep.subr.mxu0 0.0
    %1310 = vmatpush2.msra.mxu0 0.0
    %1311 = vmatprep.subr.mxu0 0.0
    %1312 = vmatpush2.msra.mxu0 0.0
    %1313 = vmatprep.mubr.f32.mxu0 0.0
    %1314 = vmatmul.mubr.f32.gmra.mxu0 %v1247
    %v1315 = vpop.f32.mrf.mxu0
    %v1316 = vadd.f32 0.0, %v1315
    %v1317 = vpop.f32.mrf.mxu0
    %1318 = vdwg.mxu0
    %1319 = vrot.lane.b32.xlu0 %v155, 64
    %v1320 = vpop.permute.xlu0 %1319
    %v1323 = vsel %vm160, %v861, 0
    %1325 = vmatprep.subr.mxu0 0.0
    %1326 = vmatpush1.msra.mxu0 0.0
    %1327 = vmatprep.subr.mxu0 0.0
    %1328 = vmatpush1.msra.mxu0 0.0
    %1329 = vmatprep.subr.mxu0 0.0
    %1330 = vmatpush1.msra.mxu0 0.0
    %1331 = vmatprep.subr.mxu0 0.0
    %1332 = vmatpush1.msra.mxu0 0.0
    %1333 = vmatprep.subr.mxu0 0.0
    %1334 = vmatpush1.msra.mxu0 0.0
    %1335 = vmatprep.subr.mxu0 0.0
    %1336 = vmatpush1.msra.mxu0 0.0
    %1337 = vmatprep.subr.mxu0 0.0
    %1338 = vmatpush1.msra.mxu0 0.0
    %1339 = vmatprep.subr.mxu0 0.0
    %1340 = vmatpush1.msra.mxu0 0.0
    %1341 = vmatprep.subr.mxu0 0.0
    %1342 = vmatpush1.msra.mxu0 0.0
    %1343 = vmatprep.subr.mxu0 0.0
    %1344 = vmatpush1.msra.mxu0 0.0
    %1345 = vmatprep.subr.mxu0 0.0
    %1346 = vmatpush1.msra.mxu0 0.0
    %1347 = vmatprep.subr.mxu0 0.0
    %1348 = vmatpush1.msra.mxu0 0.0
    %1349 = vmatprep.subr.mxu0 0.0
    %1350 = vmatpush1.msra.mxu0 0.0
    %1351 = vmatprep.subr.mxu0 0.0
    %1352 = vmatpush1.msra.mxu0 0.0
    %1353 = vmatprep.subr.mxu0 0.0
    %1354 = vmatpush1.msra.mxu0 0.0
    %1355 = vmatprep.subr.mxu0 0.0
    %1356 = vmatpush1.msra.mxu0 %v1320
    %1357 = vmatprep.subr.mxu0 0.0
    %1358 = vmatpush2.msra.mxu0 0.0
    %1359 = vmatprep.subr.mxu0 0.0
    %1360 = vmatpush2.msra.mxu0 0.0
    %1361 = vmatprep.subr.mxu0 0.0
    %1362 = vmatpush2.msra.mxu0 0.0
    %1363 = vmatprep.subr.mxu0 0.0
    %1364 = vmatpush2.msra.mxu0 0.0
    %1365 = vmatprep.subr.mxu0 0.0
    %1366 = vmatpush2.msra.mxu0 0.0
    %1367 = vmatprep.subr.mxu0 0.0
    %1368 = vmatpush2.msra.mxu0 0.0
    %1369 = vmatprep.subr.mxu0 0.0
    %1370 = vmatpush2.msra.mxu0 0.0
    %1371 = vmatprep.subr.mxu0 0.0
    %1372 = vmatpush2.msra.mxu0 0.0
    %1373 = vmatprep.subr.mxu0 0.0
    %1374 = vmatpush2.msra.mxu0 0.0
    %1375 = vmatprep.subr.mxu0 0.0
    %1376 = vmatpush2.msra.mxu0 0.0
    %1377 = vmatprep.subr.mxu0 0.0
    %1378 = vmatpush2.msra.mxu0 0.0
    %1379 = vmatprep.subr.mxu0 0.0
    %1380 = vmatpush2.msra.mxu0 0.0
    %1381 = vmatprep.subr.mxu0 0.0
    %1382 = vmatpush2.msra.mxu0 0.0
    %1383 = vmatprep.subr.mxu0 0.0
    %1384 = vmatpush2.msra.mxu0 0.0
    %1385 = vmatprep.subr.mxu0 0.0
    %1386 = vmatpush2.msra.mxu0 0.0
    %1387 = vmatprep.subr.mxu0 0.0
    %1388 = vmatpush2.msra.mxu0 0.0
    %1389 = vmatprep.mubr.f32.mxu0 0.0
    %1390 = vmatmul.mubr.f32.gmra.mxu0 %v1323
    %v1391 = vpop.f32.mrf.mxu0
    %v1392 = vadd.f32 0.0, %v1391
    %v1393 = vpop.f32.mrf.mxu0
    %1394 = vdwg.mxu0
    %1395 = vrot.lane.b32.xlu0 %v157, 64
    %v1396 = vpop.permute.xlu0 %1395
    %v1399 = vsel %vm160, %v862, 0
    %1401 = vmatprep.subr.mxu0 0.0
    %1402 = vmatpush1.msra.mxu0 0.0
    %1403 = vmatprep.subr.mxu0 0.0
    %1404 = vmatpush1.msra.mxu0 0.0
    %1405 = vmatprep.subr.mxu0 0.0
    %1406 = vmatpush1.msra.mxu0 0.0
    %1407 = vmatprep.subr.mxu0 0.0
    %1408 = vmatpush1.msra.mxu0 0.0
    %1409 = vmatprep.subr.mxu0 0.0
    %1410 = vmatpush1.msra.mxu0 0.0
    %1411 = vmatprep.subr.mxu0 0.0
    %1412 = vmatpush1.msra.mxu0 0.0
    %1413 = vmatprep.subr.mxu0 0.0
    %1414 = vmatpush1.msra.mxu0 0.0
    %1415 = vmatprep.subr.mxu0 0.0
    %1416 = vmatpush1.msra.mxu0 0.0
    %1417 = vmatprep.subr.mxu0 0.0
    %1418 = vmatpush1.msra.mxu0 0.0
    %1419 = vmatprep.subr.mxu0 0.0
    %1420 = vmatpush1.msra.mxu0 0.0
    %1421 = vmatprep.subr.mxu0 0.0
    %1422 = vmatpush1.msra.mxu0 0.0
    %1423 = vmatprep.subr.mxu0 0.0
    %1424 = vmatpush1.msra.mxu0 0.0
    %1425 = vmatprep.subr.mxu0 0.0
    %1426 = vmatpush1.msra.mxu0 0.0
    %1427 = vmatprep.subr.mxu0 0.0
    %1428 = vmatpush1.msra.mxu0 0.0
    %1429 = vmatprep.subr.mxu0 0.0
    %1430 = vmatpush1.msra.mxu0 0.0
    %1431 = vmatprep.subr.mxu0 0.0
    %1432 = vmatpush1.msra.mxu0 %v1396
    %1433 = vmatprep.subr.mxu0 0.0
    %1434 = vmatpush2.msra.mxu0 0.0
    %1435 = vmatprep.subr.mxu0 0.0
    %1436 = vmatpush2.msra.mxu0 0.0
    %1437 = vmatprep.subr.mxu0 0.0
    %1438 = vmatpush2.msra.mxu0 0.0
    %1439 = vmatprep.subr.mxu0 0.0
    %1440 = vmatpush2.msra.mxu0 0.0
    %1441 = vmatprep.subr.mxu0 0.0
    %1442 = vmatpush2.msra.mxu0 0.0
    %1443 = vmatprep.subr.mxu0 0.0
    %1444 = vmatpush2.msra.mxu0 0.0
    %1445 = vmatprep.subr.mxu0 0.0
    %1446 = vmatpush2.msra.mxu0 0.0
    %1447 = vmatprep.subr.mxu0 0.0
    %1448 = vmatpush2.msra.mxu0 0.0
    %1449 = vmatprep.subr.mxu0 0.0
    %1450 = vmatpush2.msra.mxu0 0.0
    %1451 = vmatprep.subr.mxu0 0.0
    %1452 = vmatpush2.msra.mxu0 0.0
    %1453 = vmatprep.subr.mxu0 0.0
    %1454 = vmatpush2.msra.mxu0 0.0
    %1455 = vmatprep.subr.mxu0 0.0
    %1456 = vmatpush2.msra.mxu0 0.0
    %1457 = vmatprep.subr.mxu0 0.0
    %1458 = vmatpush2.msra.mxu0 0.0
    %1459 = vmatprep.subr.mxu0 0.0
    %1460 = vmatpush2.msra.mxu0 0.0
    %1461 = vmatprep.subr.mxu0 0.0
    %1462 = vmatpush2.msra.mxu0 0.0
    %1463 = vmatprep.subr.mxu0 0.0
    %1464 = vmatpush2.msra.mxu0 0.0
    %1465 = vmatprep.mubr.f32.mxu0 0.0
    %1466 = vmatmul.mubr.f32.gmra.mxu0 %v1399
    %v1467 = vpop.f32.mrf.mxu0
    %v1468 = vadd.f32 0.0, %v1467
    %v1469 = vpop.f32.mrf.mxu0
    %1470 = vdwg.mxu0
    %1473 = vrot.lane.b32.xlu0 %v1088, 8
    %v1474 = vpop.permute.xlu0 %1473
    %1475 = vrot.lane.b32.xlu0 %v1164, 8
    %v1476 = vpop.permute.xlu0 %1475
    %1481 = vrot.lane.b32.xlu0 %v1240, 16
    %v1482 = vpop.permute.xlu0 %1481
    %1483 = vrot.lane.b32.xlu0 %v1316, 16
    %v1484 = vpop.permute.xlu0 %1483
    %1489 = vrot.lane.b32.xlu0 %v1392, 24
    %v1490 = vpop.permute.xlu0 %1489
    %1491 = vrot.lane.b32.xlu0 %v1468, 24
    %v1492 = vpop.permute.xlu0 %1491
    %v1495 = vsel %vm160, %v936, %v1474
    %v1496 = vsel %vm160, %v1012, %v1476
    %vm1497 = vcmask 130048
    %v1498 = vsel %vm1497, %v1495, %v1482
    %v1499 = vsel %vm1497, %v1496, %v1484
    %vm1500 = vcmask 195584
    %v1501 = vsel %vm1500, %v1498, %v1490
    %v1502 = vsel %vm1500, %v1499, %v1492
    %v1503 = vld [vmem:[#allocation7] sm:$0xff]
    %v1504 = vld [vmem:[#allocation7 + $0x8] sm:$0xff]
    %v1505 = vld [vmem:[#allocation7 + $0x10] sm:$0xff]
    %v1506 = vld [vmem:[#allocation7 + $0x18] sm:$0xff]
    %v1508 = vsel %vm62, %v1501, 0
    %v1511 = vsel %vm62, %v1502, 0
    %1513 = vmatprep.subr.mxu0 0.0
    %1514 = vmatpush1.msra.mxu0 0.0
    %1515 = vmatprep.subr.mxu0 0.0
    %1516 = vmatpush1.msra.mxu0 0.0
    %1517 = vmatprep.subr.mxu0 0.0
    %1518 = vmatpush1.msra.mxu0 0.0
    %1519 = vmatprep.subr.mxu0 0.0
    %1520 = vmatpush1.msra.mxu0 0.0
    %1521 = vmatprep.subr.mxu0 0.0
    %1522 = vmatpush1.msra.mxu0 0.0
    %1523 = vmatprep.subr.mxu0 0.0
    %1524 = vmatpush1.msra.mxu0 0.0
    %1525 = vmatprep.subr.mxu0 0.0
    %1526 = vmatpush1.msra.mxu0 0.0
    %1527 = vmatprep.subr.mxu0 0.0
    %1528 = vmatpush1.msra.mxu0 0.0
    %1529 = vmatprep.subr.mxu0 0.0
    %1530 = vmatpush1.msra.mxu0 0.0
    %1531 = vmatprep.subr.mxu0 0.0
    %1532 = vmatpush1.msra.mxu0 0.0
    %1533 = vmatprep.subr.mxu0 0.0
    %1534 = vmatpush1.msra.mxu0 0.0
    %1535 = vmatprep.subr.mxu0 0.0
    %1536 = vmatpush1.msra.mxu0 0.0
    %1537 = vmatprep.subr.mxu0 0.0
    %1538 = vmatpush1.msra.mxu0 %v1506
    %1539 = vmatprep.subr.mxu0 0.0
    %1540 = vmatpush1.msra.mxu0 %v1505
    %1541 = vmatprep.subr.mxu0 0.0
    %1542 = vmatpush1.msra.mxu0 %v1504
    %1543 = vmatprep.subr.mxu0 0.0
    %1544 = vmatpush1.msra.mxu0 %v1503
    %1545 = vmatprep.subr.mxu0 0.0
    %1546 = vmatpush2.msra.mxu0 0.0
    %1547 = vmatprep.subr.mxu0 0.0
    %1548 = vmatpush2.msra.mxu0 0.0
    %1549 = vmatprep.subr.mxu0 0.0
    %1550 = vmatpush2.msra.mxu0 0.0
    %1551 = vmatprep.subr.mxu0 0.0
    %1552 = vmatpush2.msra.mxu0 0.0
    %1553 = vmatprep.subr.mxu0 0.0
    %1554 = vmatpush2.msra.mxu0 0.0
    %1555 = vmatprep.subr.mxu0 0.0
    %1556 = vmatpush2.msra.mxu0 0.0
    %1557 = vmatprep.subr.mxu0 0.0
    %1558 = vmatpush2.msra.mxu0 0.0
    %1559 = vmatprep.subr.mxu0 0.0
    %1560 = vmatpush2.msra.mxu0 0.0
    %1561 = vmatprep.subr.mxu0 0.0
    %1562 = vmatpush2.msra.mxu0 0.0
    %1563 = vmatprep.subr.mxu0 0.0
    %1564 = vmatpush2.msra.mxu0 0.0
    %1565 = vmatprep.subr.mxu0 0.0
    %1566 = vmatpush2.msra.mxu0 0.0
    %1567 = vmatprep.subr.mxu0 0.0
    %1568 = vmatpush2.msra.mxu0 0.0
    %1569 = vmatprep.subr.mxu0 0.0
    %1570 = vmatpush2.msra.mxu0 0.0
    %1571 = vmatprep.subr.mxu0 0.0
    %1572 = vmatpush2.msra.mxu0 0.0
    %1573 = vmatprep.subr.mxu0 0.0
    %1574 = vmatpush2.msra.mxu0 0.0
    %1575 = vmatprep.subr.mxu0 0.0
    %1576 = vmatpush2.msra.mxu0 0.0
    %1577 = vmatprep.mubr.f32.mxu0 0.0
    %1578 = vmatmul.mubr.f32.gmra.mxu0 %v1508
    %v1579 = vpop.f32.mrf.mxu0
    %v1580 = vadd.f32 0.0, %v1579
    %v1581 = vpop.f32.mrf.mxu0
    %1582 = vmatprep.mubr.f32.mxu0 0.0
    %1583 = vmatmul.mubr.f32.gmra.mxu0 %v1511
    %v1584 = vpop.f32.mrf.mxu0
    %v1585 = vadd.f32 0.0, %v1584
    %v1586 = vpop.f32.mrf.mxu0
    %1587 = vdwg.mxu0
    %1588 = vst.msk [vmem:[#allocation8] sm:$0xff] %vm62, %v1580
    %1589 = vst.msk [vmem:[#allocation8 + $0x8] sm:$0xff] %vm62, %v1585
    // Predicated region
    $region26: #{tpu_custom_call.1} parent=1 // pred_check
      _
    $region27: #{tpu_custom_call.1} parent=1 // pred_check_branch
      %1591 = sbr.rel (0) target = $region29
    $region28: #{tpu_custom_call.1} parent=1 // pred_region
      %s1593 = ssub.s32 256, 256
      %1594 = vsyncadd [#allocation4], %s1593
      %s1595 = sshll.u32 [#allocation8], 4
      %s1596 = int_to_ptr.vmem [resolvable:$true] %s1595
      %1601 = dma.vmem_to_hbm [thread:$0]  %s1596, 256, %s3, [#allocation4], 128, 128, 8
    $region29: #{tpu_custom_call.1} parent=1 // pred_fallthru
      _
    // Predicated region
    $region30: #{tpu_custom_call.1} parent=1 // pred_check
      _
    $region31: #{tpu_custom_call.1} parent=1 // pred_check_branch
      %1603 = sbr.rel (0) target = $region33
    $region32: #{tpu_custom_call.1} parent=1 // pred_region
      %1604 = dma.done [#allocation4], 256
    $region33: #{tpu_custom_call.1} parent=1 // pred_fallthru
      _
    %1605 = vsyncpa [#allocation3], 1
    %1606 = vsyncpa [#allocation6], 1
    %1607 = vsyncpa [#allocation4], 1

</llo_original>
